<compile_context>
chip_gen: v7x
topology: tpu7x:2x2x1
jax: 0.10.0
libtpu: 0.0.40
codegen_flags: <defaults>
</compile_context>

<pallas_src>
import functools

import jax
import jax.numpy as jnp
from jax.experimental import pallas as pl
from jax.experimental.pallas import tpu as pltpu


# --------------------------------------------------------------------------
# helpers
# --------------------------------------------------------------------------
def _round_up(n, m):
    return ((n + m - 1) // m) * m


def _pad2d(a, rows, cols):
    return jnp.pad(a, ((0, rows - a.shape[0]), (0, cols - a.shape[1])))


def _vmem_limit_bytes():
    """Generation-aware scoped-VMEM limit (v5e/v6e: 64 MiB, v7x: ~48 MiB)."""
    cap = 128 * 1024 * 1024
    try:
        info = pltpu.get_tpu_info()
        cap = int(getattr(info, "vmem_capacity_bytes", cap) or cap)
    except Exception:
        pass
    return int(min(64 * 1024 * 1024, max(cap * 3 // 4, 16 * 1024 * 1024)))


def _pick_blocks(N, Fp, Hp, Cp, vmem_limit):
    """Pick (bm, bk): big row blocks (fewer f re-reads / grid steps), bk >= 256
    where possible (fills the 256-wide MXU on v6e/v7x), and keep N//bm >= 2 so
    the 'parallel' row axis can shard across both v7x TensorCores."""
    budget = int(vmem_limit * 0.6)

    bm_cands = [c for c in (2048, 1024, 512, 256, 128) if N % c == 0]
    bm = next((c for c in bm_cands if N // c >= 2), None)
    if bm is None:
        bm = bm_cands[0] if bm_cands else N
    bk_cands = [c for c in (1024, 512, 256, 128) if N % c == 0]
    bk = bk_cands[0] if bk_cands else N

    def prop_ws(bm_, bk_):
        return (2 * bm_ * bk_ * 2          # adj (bf16), double-buffered
                + 2 * bk_ * Cp * 2         # f  (bf16)
                + 2 * bm_ * Cp * 4         # z  (f32)
                + 2 * 2 * bm_ * Cp * 4     # up to two f32 outputs
                + bm_ * Cp * 4)            # accumulator scratch

    def mlp_ws(bm_):
        return (2 * bm_ * Fp * 2 + 2 * bm_ * Cp * 4           # x, feature
                + 2 * (Fp * Hp + Hp * Hp + Hp * Cp) * 2       # bf16 weights
                + 2 * bm_ * Cp * 4 + 2 * bm_ * Cp * 4)        # z, f0 outputs

    while ((prop_ws(bm, bk) > budget or mlp_ws(bm) > budget)
           and bm > 128 and N % (bm // 2) == 0):
        bm //= 2
    while prop_ws(bm, bk) > budget and bk > 256 and N % (bk // 2) == 0:
        bk //= 2
    return bm, bk


def prepare_adj(adj):
    """Cast the dense row-normalized adjacency to bf16 ONCE per graph so the
    per-forward wrapper never redoes an O(N^2) HBM cast pass."""
    # TODO(synk): fp8 (v7x) / int8+per-row-scale (v6e) adj quantization would
    # halve the dominant adj HBM stream again; omitted pending accuracy checks.
    return adj.astype(jnp.bfloat16)


# --------------------------------------------------------------------------
# kernel 1: MLP (bf16 matmuls, f32 accumulation) + Lazy_Prop initial mix
# --------------------------------------------------------------------------
def mlp_mix_kernel(zflag_ref, x_ref, w1_ref, b1_ref, w2_ref, b2_ref,
                   w3_ref, b3_ref, feat_ref, z_ref, f0_ref, *, beta):
    h = jnp.dot(x_ref[...], w1_ref[...],
                preferred_element_type=jnp.float32) + b1_ref[...]
    h = jnp.maximum(h, 0.0).astype(jnp.bfloat16)
    # TODO(synk): F.dropout between hidden layers omitted (inference semantics).
    h = jnp.dot(h, w2_ref[...],
                preferred_element_type=jnp.float32) + b2_ref[...]
    h = jnp.maximum(h, 0.0).astype(jnp.bfloat16)
    z = jnp.dot(h, w3_ref[...],
                preferred_element_type=jnp.float32) + b3_ref[...]

    # zflag == 1  <=>  feature_memory[id][:size] was exactly all-zero.
    feat = feat_ref[...]
    mixed = (1.0 - beta) * feat + beta * z
    f0 = jnp.where(zflag_ref[0] != 0, z, mixed)
    z_ref[...] = z
    f0_ref[...] = f0.astype(f0_ref.dtype)


# --------------------------------------------------------------------------
# kernel 2a: intermediate Lazy_Prop step  f <- (1-a)*(adj @ f) + a*z  (bf16 out)
# --------------------------------------------------------------------------
def prop_step_kernel(adj_ref, f_ref, z_ref, out_ref, acc_ref, *, alpha):
    k = pl.program_id(1)
    partial = jnp.dot(adj_ref[...], f_ref[...],
                      preferred_element_type=jnp.float32)

    @pl.when(k == 0)
    def _():
        acc_ref[...] = partial

    @pl.when(k > 0)
    def _():
        acc_ref[...] += partial

    @pl.when(k == pl.num_programs(1) - 1)
    def _():
        out_ref[...] = ((1.0 - alpha) * acc_ref[...]
                        + alpha * z_ref[...]).astype(out_ref.dtype)


# --------------------------------------------------------------------------
# kernel 2b: LAST Lazy_Prop step fused with masked log_softmax
# --------------------------------------------------------------------------
def prop_final_kernel(adj_ref, f_ref, z_ref, zout_ref, lsm_ref, acc_ref,
                      *, alpha, valid_cols):
    k = pl.program_id(1)
    partial = jnp.dot(adj_ref[...], f_ref[...],
                      preferred_element_type=jnp.float32)

    @pl.when(k == 0)
    def _():
        acc_ref[...] = partial

    @pl.when(k > 0)
    def _():
        acc_ref[...] += partial

    @pl.when(k == pl.num_programs(1) - 1)
    def _():
        f_new = (1.0 - alpha) * acc_ref[...] + alpha * z_ref[...]
        zout_ref[...] = f_new
        lane = jax.lax.broadcasted_iota(jnp.int32, f_new.shape, 1)
        fm = jnp.where(lane < valid_cols, f_new, jnp.float32(-1e30))
        m = jnp.max(fm, axis=1, keepdims=True)
        e = jnp.exp(fm - m)
        lse = jnp.log(jnp.sum(e, axis=1, keepdims=True)) + m
        lsm_ref[...] = f_new - lse


# --------------------------------------------------------------------------
# kernel 3: standalone masked log_softmax (only used when K == 0)
# --------------------------------------------------------------------------
def log_softmax_kernel(f_ref, out_ref, *, valid_cols):
    f = f_ref[...].astype(jnp.float32)
    lane = jax.lax.broadcasted_iota(jnp.int32, f.shape, 1)
    fm = jnp.where(lane < valid_cols, f, jnp.float32(-1e30))
    m = jnp.max(fm, axis=1, keepdims=True)
    e = jnp.exp(fm - m)
    lse = jnp.log(jnp.sum(e, axis=1, keepdims=True)) + m
    out_ref[...] = f - lse


# --------------------------------------------------------------------------
# wrapper
# --------------------------------------------------------------------------
def net_forward(x, params, adj, feature_memory, ids, *, K, alpha, beta, size,
                block_m=None, block_k=None):
    """Returns (log_softmax output (N, C), z_out (N, C)).

    z_out is the Lazy_Prop output (propagated logits, pre-log_softmax), i.e.
    what the PyTorch module scatters into feature_memory[id[:size]].
    Pass `adj` already in bf16 (see prepare_adj) to avoid a per-call cast.
    """
    N = x.shape[0]
    assert N % 8 == 0
    w1, b1, w2, b2, w3, b3 = params
    F_in, H = w1.shape
    C = w3.shape[1]

    Fp = _round_up(F_in, 128)
    Hp = _round_up(H, 128)
    Cp = _round_up(C, 128)
    vmem_limit = _vmem_limit_bytes()
    bm_auto, bk_auto = _pick_blocks(N, Fp, Hp, Cp, vmem_limit)
    bm = block_m if block_m is not None else bm_auto
    bk = block_k if block_k is not None else bk_auto
    assert N % bm == 0 and N % bk == 0

    # adj is the dominant HBM stream: only cast if the caller did not pre-cast.
    if adj.dtype != jnp.bfloat16:
        adj = adj.astype(jnp.bfloat16)

    # ---- pad to MXU / lane friendly shapes (zero padding) --------------------
    x_p = _pad2d(x.astype(jnp.bfloat16), N, Fp)
    w1_p = _pad2d(w1.astype(jnp.bfloat16), Fp, Hp)
    b1_p = _pad2d(b1.astype(jnp.float32), 1, Hp)
    w2_p = _pad2d(w2.astype(jnp.bfloat16), Hp, Hp)
    b2_p = _pad2d(b2.astype(jnp.float32), 1, Hp)
    w3_p = _pad2d(w3.astype(jnp.bfloat16), Hp, Cp)
    b3_p = _pad2d(b3.astype(jnp.float32), 1, Cp)

    feature = feature_memory[ids]                          # equ_preds[id]
    feat_p = _pad2d(feature.astype(jnp.float32), N, Cp)
    # torch.equal(feature[:size], zeros) -> one scalar, computed once here.
    zflag = jnp.all(feature[:size] == 0).astype(jnp.int32).reshape(1)

    # intermediate f travels in bf16 between prop steps; f32 only when K == 0.
    f0_dtype = jnp.bfloat16 if K >= 1 else jnp.float32

    cparams_rows = pltpu.CompilerParams(
        dimension_semantics=("parallel",), vmem_limit_bytes=vmem_limit)

    # ---- kernel 1: MLP + initial mix -----------------------------------------
    z_p, f_p = pl.pallas_call(
        functools.partial(mlp_mix_kernel, beta=float(beta)),
        out_shape=(jax.ShapeDtypeStruct((N, Cp), jnp.float32),
                   jax.ShapeDtypeStruct((N, Cp), f0_dtype)),
        grid=(N // bm,),
        in_specs=[
            pl.BlockSpec(memory_space=pltpu.MemorySpace.SMEM),   # zflag (scalar)
            pl.BlockSpec((bm, Fp), lambda i: (i, 0)),            # x (bf16)
            pl.BlockSpec((Fp, Hp), lambda i: (0, 0)),            # w1
            pl.BlockSpec((1, Hp), lambda i: (0, 0)),             # b1
            pl.BlockSpec((Hp, Hp), lambda i: (0, 0)),            # w2
            pl.BlockSpec((1, Hp), lambda i: (0, 0)),             # b2
            pl.BlockSpec((Hp, Cp), lambda i: (0, 0)),            # w3
            pl.BlockSpec((1, Cp), lambda i: (0, 0)),             # b3
            pl.BlockSpec((bm, Cp), lambda i: (i, 0)),            # feature
        ],
        out_specs=(pl.BlockSpec((bm, Cp), lambda i: (i, 0)),
                   pl.BlockSpec((bm, Cp), lambda i: (i, 0))),
        compiler_params=cparams_rows,
        cost_estimate=pl.CostEstimate(
            flops=2 * N * (Fp * Hp + Hp * Hp + Hp * Cp),
            transcendentals=0,
            bytes_accessed=2 * N * Fp + 4 * 3 * N * Cp
                           + 2 * (Fp * Hp + Hp * Hp + Hp * Cp)),
    )(zflag, x_p, w1_p, b1_p, w2_p, b2_p, w3_p, b3_p, feat_p)

    if K == 0:
        out_p = pl.pallas_call(
            functools.partial(log_softmax_kernel, valid_cols=C),
            out_shape=jax.ShapeDtypeStruct((N, Cp), jnp.float32),
            grid=(N // bm,),
            in_specs=[pl.BlockSpec((bm, Cp), lambda i: (i, 0))],
            out_specs=pl.BlockSpec((bm, Cp), lambda i: (i, 0)),
            compiler_params=cparams_rows,
        )(f_p)
        return out_p[:, :C], f_p[:, :C]

    # ---- kernels 2: K propagation steps (tiled adj @ f), last one fused with
    # log_softmax ----------------------------------------------------------------
    cparams_prop = pltpu.CompilerParams(
        dimension_semantics=("parallel", "arbitrary"),
        vmem_limit_bytes=vmem_limit)
    prop_grid = (N // bm, N // bk)
    adj_spec = pl.BlockSpec((bm, bk), lambda i, k: (i, k))
    f_spec = pl.BlockSpec((bk, Cp), lambda i, k: (k, 0))
    z_spec = pl.BlockSpec((bm, Cp), lambda i, k: (i, 0))
    o_spec = pl.BlockSpec((bm, Cp), lambda i, k: (i, 0))

    prop_step = pl.pallas_call(
        functools.partial(prop_step_kernel, alpha=float(alpha)),
        out_shape=jax.ShapeDtypeStruct((N, Cp), jnp.bfloat16),
        grid=prop_grid,
        in_specs=[adj_spec, f_spec, z_spec],
        out_specs=o_spec,
        scratch_shapes=[pltpu.VMEM((bm, Cp), jnp.float32)],
        compiler_params=cparams_prop,
        cost_estimate=pl.CostEstimate(
            flops=2 * N * N * Cp, transcendentals=0,
            bytes_accessed=2 * N * N + 2 * N * Cp * (N // bm)
                           + 4 * N * Cp + 2 * N * Cp),
    )

    prop_final = pl.pallas_call(
        functools.partial(prop_final_kernel, alpha=float(alpha), valid_cols=C),
        out_shape=(jax.ShapeDtypeStruct((N, Cp), jnp.float32),   # z_out
                   jax.ShapeDtypeStruct((N, Cp), jnp.float32)),  # log_softmax
        grid=prop_grid,
        in_specs=[adj_spec, f_spec, z_spec],
        out_specs=(o_spec, o_spec),
        scratch_shapes=[pltpu.VMEM((bm, Cp), jnp.float32)],
        compiler_params=cparams_prop,
        cost_estimate=pl.CostEstimate(
            flops=2 * N * N * Cp + 6 * N * Cp, transcendentals=N * Cp,
            bytes_accessed=2 * N * N + 2 * N * Cp * (N // bm)
                           + 4 * N * Cp * 3),
    )

    # TODO(synk): for graphs where the full (N, Cp) f fits VMEM, the K steps
    # could be fused into one pallas_call with a persistent ping-pong VMEM f;
    # kept as K calls so the row axis stays megacore-parallel on v7x.
    for _ in range(K - 1):
        f_p = prop_step(adj, f_p, z_p)
    z_out_p, out_p = prop_final(adj, f_p, z_p)

    # TODO(synk): feature_memory[id[:size]] = z_out[:size] writeback is done by
    # the caller in plain JAX (data-dependent scatter; kept outside the kernel).
    return out_p[:, :C], z_out_p[:, :C]


# --------------------------------------------------------------------------
# pure-JAX reference (for correctness check) and init helpers
# --------------------------------------------------------------------------
def _reference(x, params, adj, feature_memory, ids, *, K, alpha, beta, size):
    w1, b1, w2, b2, w3, b3 = params
    h = jnp.maximum(x @ w1 + b1, 0.0)
    h = jnp.maximum(h @ w2 + b2, 0.0)
    z = h @ w3 + b3
    feat = feature_memory[ids]
    f = jnp.where(jnp.all(feat[:size] == 0), z, (1.0 - beta) * feat + beta * z)
    for _ in range(K):
        f = (1.0 - alpha) * (adj @ f) + alpha * z
    return jax.nn.log_softmax(f, axis=1), f


def _linear_init(key, fan_in, fan_out):
    # PyTorch nn.Linear default init: U(-1/sqrt(fan_in), 1/sqrt(fan_in))
    bound = 1.0 / (fan_in ** 0.5)
    kw, kb = jax.random.split(key)
    w = jax.random.uniform(kw, (fan_in, fan_out), jnp.float32, -bound, bound)
    b = jax.random.uniform(kb, (1, fan_out), jnp.float32, -bound, bound)
    return w, b


if __name__ == "__main__":
    key = jax.random.PRNGKey(0)
    # Small shapes consistent with the module: num_nodes=256, num_features=16,
    # hidden_channels=32, num_classes=8, num_layers=3 (-> 3 Linear layers).
    N, F_in, H, C = 256, 16, 32, 8
    K, alpha, beta, theta = 2, 0.1, 0.5, 0.5
    size = 192
    ids = jnp.arange(N)

    keys = jax.random.split(key, 6)
    x = jax.random.normal(keys[0], (N, F_in), jnp.float32)

    # Deterministic symmetric row-normalized adjacency with self-loops.
    a = jax.random.uniform(keys[1], (N, N), jnp.float32)
    a = (a > 0.95).astype(jnp.float32)
    a = a + a.T + jnp.eye(N, dtype=jnp.float32)
    adj = a / jnp.sum(a, axis=1, keepdims=True)

    w1, b1 = _linear_init(keys[2], F_in, H)
    w2, b2 = _linear_init(keys[3], H, H)
    w3, b3 = _linear_init(keys[4], H, C)
    params = (w1, b1, w2, b2, w3, b3)

    # feature_memory starts as zeros (as in Net.__init__).
    feature_memory = jnp.zeros((N, C), jnp.float32)

    # Hoisted one-time bf16 cast of adj (the dominant HBM stream).
    adj_bf16 = prepare_adj(adj)
    jax.block_until_ready(adj_bf16)

    # ---- forward 1 (zero feature_memory branch) ------------------------------
    out, z_out = net_forward(x, params, adj_bf16, feature_memory, ids,
                             K=K, alpha=alpha, beta=beta, size=size)
    jax.block_until_ready((out, z_out))

    out_ref, z_ref = _reference(x, params, adj, feature_memory, ids,
                                K=K, alpha=alpha, beta=beta, size=size)
    assert out.shape == (N, C) and z_out.shape == (N, C)
    assert float(jnp.max(jnp.abs(out - out_ref))) < 8e-2   # bf16 adj/MLP/f
    assert float(jnp.max(jnp.abs(z_out - z_ref))) < 8e-2

    # Mimic the in-place side effect: feature_memory[id[:size]] = z_out[:size]
    feature_memory = feature_memory.at[ids[:size]].set(z_out[:size])
    jax.block_until_ready(feature_memory)

    # ---- forward 2 (non-zero feature_memory -> mixed branch) -----------------
    out2, z_out2 = net_forward(x, params, adj_bf16, feature_memory, ids,
                               K=K, alpha=alpha, beta=beta, size=size)
    jax.block_until_ready((out2, z_out2))
    out2_ref, z2_ref = _reference(x, params, adj, feature_memory, ids,
                                  K=K, alpha=alpha, beta=beta, size=size)
    assert float(jnp.max(jnp.abs(out2 - out2_ref))) < 8e-2
    assert float(jnp.max(jnp.abs(z_out2 - z2_ref))) < 8e-2

    print("KERNEL_OK")
</pallas_src>

<mosaic_0001>
module attributes {stable_mosaic.version = 11 : i64} {
  func.func @mlp_mix_kernel(%arg0: i32, %arg1: memref<1xi32, #tpu.memory_space<smem>>, %arg2: memref<128x128xbf16, #tpu.memory_space<vmem>>, %arg3: memref<128x128xbf16, #tpu.memory_space<vmem>>, %arg4: memref<1x128xf32, #tpu.memory_space<vmem>>, %arg5: memref<128x128xbf16, #tpu.memory_space<vmem>>, %arg6: memref<1x128xf32, #tpu.memory_space<vmem>>, %arg7: memref<128x128xbf16, #tpu.memory_space<vmem>>, %arg8: memref<1x128xf32, #tpu.memory_space<vmem>>, %arg9: memref<128x128xf32, #tpu.memory_space<vmem>>, %arg10: memref<128x128xf32, #tpu.memory_space<vmem>>, %arg11: memref<128x128xbf16, #tpu.memory_space<vmem>>) attributes {dimension_semantics = [#tpu.dimension_semantics<parallel>], iteration_bounds = array<i64: 2>, scalar_prefetch = 0 : i64, scratch_operands = 0 : i64, tpu.core_type = #tpu.core_type<tc>, window_params = [{transform_indices = @transform_0, window_bounds = array<i64: 1>}, {transform_indices = @transform_1, window_bounds = array<i64: 128, 128>}, {pipeline_mode = #tpu.pipeline_mode<synchronous>, transform_indices = @transform_2, window_bounds = array<i64: 128, 128>}, {pipeline_mode = #tpu.pipeline_mode<synchronous>, transform_indices = @transform_3, window_bounds = array<i64: 1, 128>}, {pipeline_mode = #tpu.pipeline_mode<synchronous>, transform_indices = @transform_4, window_bounds = array<i64: 128, 128>}, {pipeline_mode = #tpu.pipeline_mode<synchronous>, transform_indices = @transform_5, window_bounds = array<i64: 1, 128>}, {pipeline_mode = #tpu.pipeline_mode<synchronous>, transform_indices = @transform_6, window_bounds = array<i64: 128, 128>}, {pipeline_mode = #tpu.pipeline_mode<synchronous>, transform_indices = @transform_7, window_bounds = array<i64: 1, 128>}, {transform_indices = @transform_8, window_bounds = array<i64: 128, 128>}, {transform_indices = @transform_9, window_bounds = array<i64: 128, 128>}, {transform_indices = @transform_10, window_bounds = array<i64: 128, 128>}]} {
    %c0 = arith.constant 0 : index
    %c0_0 = arith.constant 0 : index
    %0 = vector.load %arg2[%c0, %c0_0] : memref<128x128xbf16, #tpu.memory_space<vmem>>, vector<128x128xbf16>
    %c0_1 = arith.constant 0 : index
    %c0_2 = arith.constant 0 : index
    %1 = vector.load %arg3[%c0_1, %c0_2] : memref<128x128xbf16, #tpu.memory_space<vmem>>, vector<128x128xbf16>
    %cst = arith.constant dense<0.000000e+00> : vector<128x128xf32>
    %2 = tpu.matmul %0, %1, %cst {dimension_numbers = #tpu.dot_dimension_numbers<[1], [0], [0], [1], [0, 0, 1, 1], [], []>} : vector<128x128xbf16>, vector<128x128xbf16>, vector<128x128xf32> -> vector<128x128xf32>
    %c0_3 = arith.constant 0 : index
    %c0_4 = arith.constant 0 : index
    %3 = vector.load %arg4[%c0_3, %c0_4] : memref<1x128xf32, #tpu.memory_space<vmem>>, vector<1x128xf32>
    %4 = vector.broadcast %3 : vector<1x128xf32> to vector<128x128xf32>
    %5 = arith.addf %2, %4 : vector<128x128xf32>
    %cst_5 = arith.constant 0.000000e+00 : f32
    %6 = vector.broadcast %cst_5 : f32 to vector<128x128xf32>
    %7 = arith.maximumf %5, %6 : vector<128x128xf32>
    %8 = arith.truncf %7 : vector<128x128xf32> to vector<128x128xbf16>
    %c0_6 = arith.constant 0 : index
    %c0_7 = arith.constant 0 : index
    %9 = vector.load %arg5[%c0_6, %c0_7] : memref<128x128xbf16, #tpu.memory_space<vmem>>, vector<128x128xbf16>
    %cst_8 = arith.constant dense<0.000000e+00> : vector<128x128xf32>
    %10 = tpu.matmul %8, %9, %cst_8 {dimension_numbers = #tpu.dot_dimension_numbers<[1], [0], [0], [1], [0, 0, 1, 1], [], []>} : vector<128x128xbf16>, vector<128x128xbf16>, vector<128x128xf32> -> vector<128x128xf32>
    %c0_9 = arith.constant 0 : index
    %c0_10 = arith.constant 0 : index
    %11 = vector.load %arg6[%c0_9, %c0_10] : memref<1x128xf32, #tpu.memory_space<vmem>>, vector<1x128xf32>
    %12 = vector.broadcast %11 : vector<1x128xf32> to vector<128x128xf32>
    %13 = arith.addf %10, %12 : vector<128x128xf32>
    %cst_11 = arith.constant 0.000000e+00 : f32
    %14 = vector.broadcast %cst_11 : f32 to vector<128x128xf32>
    %15 = arith.maximumf %13, %14 : vector<128x128xf32>
    %16 = arith.truncf %15 : vector<128x128xf32> to vector<128x128xbf16>
    %c0_12 = arith.constant 0 : index
    %c0_13 = arith.constant 0 : index
    %17 = vector.load %arg7[%c0_12, %c0_13] : memref<128x128xbf16, #tpu.memory_space<vmem>>, vector<128x128xbf16>
    %cst_14 = arith.constant dense<0.000000e+00> : vector<128x128xf32>
    %18 = tpu.matmul %16, %17, %cst_14 {dimension_numbers = #tpu.dot_dimension_numbers<[1], [0], [0], [1], [0, 0, 1, 1], [], []>} : vector<128x128xbf16>, vector<128x128xbf16>, vector<128x128xf32> -> vector<128x128xf32>
    %c0_15 = arith.constant 0 : index
    %c0_16 = arith.constant 0 : index
    %19 = vector.load %arg8[%c0_15, %c0_16] : memref<1x128xf32, #tpu.memory_space<vmem>>, vector<1x128xf32>
    %20 = vector.broadcast %19 : vector<1x128xf32> to vector<128x128xf32>
    %21 = arith.addf %18, %20 : vector<128x128xf32>
    %c0_17 = arith.constant 0 : index
    %c0_18 = arith.constant 0 : index
    %22 = vector.load %arg9[%c0_17, %c0_18] : memref<128x128xf32, #tpu.memory_space<vmem>>, vector<128x128xf32>
    %cst_19 = arith.constant 5.000000e-01 : f32
    %23 = vector.broadcast %cst_19 : f32 to vector<128x128xf32>
    %24 = arith.mulf %23, %22 : vector<128x128xf32>
    %cst_20 = arith.constant 5.000000e-01 : f32
    %25 = vector.broadcast %cst_20 : f32 to vector<128x128xf32>
    %26 = arith.mulf %25, %21 : vector<128x128xf32>
    %27 = arith.addf %24, %26 : vector<128x128xf32>
    %c0_21 = arith.constant 0 : index
    %28 = memref.load %arg1[%c0_21] : memref<1xi32, #tpu.memory_space<smem>>
    %c0_i32 = arith.constant 0 : i32
    %29 = arith.cmpi ne, %28, %c0_i32 : i32
    %30 = arith.select %29, %21, %27 : vector<128x128xf32>
    %c0_22 = arith.constant 0 : index
    %c0_23 = arith.constant 0 : index
    %31 = vector.load %arg10[%c0_22, %c0_23] : memref<128x128xf32, #tpu.memory_space<vmem>>, vector<128x128xf32>
    tpu.vector_store %arg10[%c0_22, %c0_23], %21 {strides = array<i32>} : memref<128x128xf32, #tpu.memory_space<vmem>>, vector<128x128xf32>,
    %32 = arith.truncf %30 : vector<128x128xf32> to vector<128x128xbf16>
    %c0_24 = arith.constant 0 : index
    %c0_25 = arith.constant 0 : index
    %33 = vector.load %arg11[%c0_24, %c0_25] : memref<128x128xbf16, #tpu.memory_space<vmem>>, vector<128x128xbf16>
    tpu.vector_store %arg11[%c0_24, %c0_25], %32 {strides = array<i32>} : memref<128x128xbf16, #tpu.memory_space<vmem>>, vector<128x128xbf16>,
    return
  }
  func.func @transform_0(%arg0: i32) -> i32 {
    %c0_i32 = arith.constant 0 : i32
    %c0_i32_0 = arith.constant 0 : i32
    return %c0_i32 : i32
  }
  func.func @transform_1(%arg0: i32) -> (i32, i32) {
    %c0_i32 = arith.constant 0 : i32
    %c0_i32_0 = arith.constant 0 : i32
    return %arg0, %c0_i32 : i32, i32
  }
  func.func @transform_2(%arg0: i32) -> (i32, i32) {
    %c0_i32 = arith.constant 0 : i32
    %c0_i32_0 = arith.constant 0 : i32
    %c0_i32_1 = arith.constant 0 : i32
    return %c0_i32, %c0_i32_0 : i32, i32
  }
  func.func @transform_3(%arg0: i32) -> (i32, i32) {
    %c0_i32 = arith.constant 0 : i32
    %c0_i32_0 = arith.constant 0 : i32
    %c0_i32_1 = arith.constant 0 : i32
    return %c0_i32, %c0_i32_0 : i32, i32
  }
  func.func @transform_4(%arg0: i32) -> (i32, i32) {
    %c0_i32 = arith.constant 0 : i32
    %c0_i32_0 = arith.constant 0 : i32
    %c0_i32_1 = arith.constant 0 : i32
    return %c0_i32, %c0_i32_0 : i32, i32
  }
  func.func @transform_5(%arg0: i32) -> (i32, i32) {
    %c0_i32 = arith.constant 0 : i32
    %c0_i32_0 = arith.constant 0 : i32
    %c0_i32_1 = arith.constant 0 : i32
    return %c0_i32, %c0_i32_0 : i32, i32
  }
  func.func @transform_6(%arg0: i32) -> (i32, i32) {
    %c0_i32 = arith.constant 0 : i32
    %c0_i32_0 = arith.constant 0 : i32
    %c0_i32_1 = arith.constant 0 : i32
    return %c0_i32, %c0_i32_0 : i32, i32
  }
  func.func @transform_7(%arg0: i32) -> (i32, i32) {
    %c0_i32 = arith.constant 0 : i32
    %c0_i32_0 = arith.constant 0 : i32
    %c0_i32_1 = arith.constant 0 : i32
    return %c0_i32, %c0_i32_0 : i32, i32
  }
  func.func @transform_8(%arg0: i32) -> (i32, i32) {
    %c0_i32 = arith.constant 0 : i32
    %c0_i32_0 = arith.constant 0 : i32
    return %arg0, %c0_i32 : i32, i32
  }
  func.func @transform_9(%arg0: i32) -> (i32, i32) {
    %c0_i32 = arith.constant 0 : i32
    %c0_i32_0 = arith.constant 0 : i32
    return %arg0, %c0_i32 : i32, i32
  }
  func.func @transform_10(%arg0: i32) -> (i32, i32) {
    %c0_i32 = arith.constant 0 : i32
    %c0_i32_0 = arith.constant 0 : i32
    return %arg0, %c0_i32 : i32, i32
  }
}

</mosaic_0001>

<llo_original>
// kernel: tpu_custom_call.1
$region0: #{tpu_custom_call.1}
  #allocation0 [shape = 'u32[]', space=smem, size = 0x4, offset = 0x4, fixed_abs, tag = 'smem constant byte address 0x4 - core index']
  #allocation1 [shape = 'u32[144,128]{1,0:T(1,128)}', space=vmem, size = 0x12000, scoped, tag = 'internal scratch']
  #allocation2 [shape = 's32[1]{0:T(128)S(6)}', space=smem, size = 0x200, scoped, tag = 'scoped memory for tpu_custom_call.1']
  %s0 = inlined_call_operand.<no memory space> [shape: s32[1], index: 0, kind: input, shape index: {}]
  %s1 = inlined_call_operand.hbm [shape: bf16[256,128], index: 1, kind: input, shape index: {}]
  %s2 = inlined_call_operand.hbm [shape: bf16[128,128], index: 2, kind: input, shape index: {}]
  %s3 = inlined_call_operand.hbm [shape: f32[1,128], index: 3, kind: input, shape index: {}]
  %s4 = inlined_call_operand.hbm [shape: bf16[128,128], index: 4, kind: input, shape index: {}]
  %s5 = inlined_call_operand.hbm [shape: f32[1,128], index: 5, kind: input, shape index: {}]
  %s6 = inlined_call_operand.hbm [shape: bf16[128,128], index: 6, kind: input, shape index: {}]
  %s7 = inlined_call_operand.hbm [shape: f32[1,128], index: 7, kind: input, shape index: {}]
  %s8 = inlined_call_operand.hbm [shape: f32[256,128], index: 8, kind: input, shape index: {}]
  %s9 = inlined_call_operand.hbm [shape: f32[256,128], index: 9, kind: output, shape index: {0}]
  %s10 = inlined_call_operand.hbm [shape: bf16[256,128], index: 10, kind: output, shape index: {1}]
  %11 = xla_tuple %s9, %s10
  %s12 = sld [smem:[#allocation0]]
  $region109: #{tpu_custom_call.1} parent=0
    _
  %s14 = ssub.s32 1, %s12
  %s15 = scalar_select 0, %s14, %s12
  %16 = sst [smem:[#allocation2]] %s0
  $region1: #{tpu_custom_call.1} parent=0
    #allocation3 [shape = 'u8[65536]{0}', space=vmem, size = 0x10000, scoped, tag = 'input window, operand 1']
    #allocation4 [shape = 's32[2]{0}', space=sflag, size = 0x8, scoped, tag = 'scoped memory for tpu_custom_call.1']
    #allocation5 [shape = 's32[2]{0}', space=sflag, size = 0x8, scoped, tag = 'scoped memory for tpu_custom_call.1']
    #allocation6 [shape = 'u8[32768]{0}', space=vmem, size = 0x8000, scoped, tag = 'input window, operand 2, single buffered']
    #allocation7 [shape = 's32[1]{0}', space=sflag, size = 0x4, scoped, tag = 'scoped memory for tpu_custom_call.1']
    #allocation8 [shape = 'u8[512]{0}', space=vmem, size = 0x400, scoped, tag = 'input window, operand 3, single buffered']
    #allocation9 [shape = 'u8[32768]{0}', space=vmem, size = 0x8000, scoped, tag = 'input window, operand 4, single buffered']
    #allocation10 [shape = 's32[1]{0}', space=sflag, size = 0x4, scoped, tag = 'scoped memory for tpu_custom_call.1']
    #allocation11 [shape = 'u8[512]{0}', space=vmem, size = 0x400, scoped, tag = 'input window, operand 5, single buffered']
    #allocation12 [shape = 'u8[32768]{0}', space=vmem, size = 0x8000, scoped, tag = 'input window, operand 6, single buffered']
    #allocation13 [shape = 's32[1]{0}', space=sflag, size = 0x4, scoped, tag = 'scoped memory for tpu_custom_call.1']
    #allocation14 [shape = 'u8[512]{0}', space=vmem, size = 0x400, scoped, tag = 'input window, operand 7, single buffered']
    #allocation15 [shape = 'u8[131072]{0}', space=vmem, size = 0x20000, scoped, tag = 'input window, operand 8']
    #allocation16 [shape = 's32[2]{0}', space=sflag, size = 0x8, scoped, tag = 'scoped memory for tpu_custom_call.1']
    #allocation17 [shape = 'u8[131072]{0}', space=vmem, size = 0x20000, scoped, tag = 'output window, operand 0']
    #allocation18 [shape = 'u8[65536]{0}', space=vmem, size = 0x10000, scoped, tag = 'output window, operand 1']
    #allocation19 [shape = 's32[2]{0}', space=sflag, size = 0x8, scoped, tag = 'scoped memory for tpu_custom_call.1']
    %17 = vsyncpa [#allocation4], 0
    %s18 = scalar_lea.sflag [#allocation4], 1
    %19 = vsyncpa %s18, 0
    %20 = vsyncpa [#allocation7], 0
    %21 = vsyncpa [#allocation10], 0
    %22 = vsyncpa [#allocation13], 0
    %23 = vsyncpa [#allocation16], 0
    %s24 = scalar_lea.sflag [#allocation16], 1
    %25 = vsyncpa %s24, 0
    %26 = vsyncpa [#allocation5], 0
    %s27 = scalar_lea.sflag [#allocation5], 1
    %28 = vsyncpa %s27, 0
    %29 = vsyncpa [#allocation19], 0
    %s30 = scalar_lea.sflag [#allocation19], 1
    %31 = vsyncpa %s30, 0
    loop: start=0, step=1, limit=4
    $region2: #{tpu_custom_call.1} parent=1 // loop_pre_header
      _
    $region3: #{tpu_custom_call.1} parent=1 // loop_header
      %s33 = sphi 0, %s37
      %p34 = scmp.ge.s32.totalorder %s33, 4
      %s41 = sphi 0, %s41
      %s43 = sphi 0, %s41
      %s44 = sphi 0, %s43
      %s58 = sphi 0, %s44
      %s64 = sphi 0, %s66
      %s67 = sphi 0, %s64
      %s68 = sphi 0, %s67
      %s84 = sphi 0, %s68
      %s88 = sphi 0, %s88
      %s90 = sphi 0, %s88
      %s91 = sphi 0, %s90
      %s105 = sphi 0, %s91
      %s109 = sphi 0, %s109
      %s111 = sphi 0, %s109
      %s112 = sphi 0, %s111
      %s126 = sphi 0, %s112
      %s130 = sphi 0, %s130
      %s132 = sphi 0, %s130
      %s133 = sphi 0, %s132
      %s147 = sphi 0, %s133
      %s151 = sphi 0, %s151
      %s153 = sphi 0, %s151
      %s154 = sphi 0, %s153
      %s168 = sphi 0, %s154
      %s172 = sphi 0, %s172
      %s174 = sphi 0, %s172
      %s175 = sphi 0, %s174
      %s189 = sphi 0, %s175
      %s193 = sphi 0, %s193
      %s195 = sphi 0, %s193
      %s196 = sphi 0, %s195
      %s210 = sphi 0, %s196
      %s216 = sphi 0, %s218
      %s219 = sphi 0, %s216
      %s220 = sphi 0, %s219
      %s236 = sphi 0, %s220
      %s242 = sphi 0, %s244
      %s245 = sphi 0, %s242
      %s246 = sphi 0, %s245
      %s262 = sphi 0, %s246
      %s268 = sphi 0, %s270
      %s271 = sphi 0, %s268
      %s272 = sphi 0, %s271
      %s288 = sphi 0, %s272
    $region4: #{tpu_custom_call.1} parent=1 // loop_header_branch
      %36 = sbr.rel (%p34) target = $region8
    $region5: #{tpu_custom_call.1} parent=1 // loop_body
      %s38 = ssub.s32 %s33, 1
      %s39 = ssub.s32 %s33, 2
      %s40 = sadd.s32 %s33, 1
      %s42 = sadd.s32 %s41, 1
      %p45 = scmp.eq.s32.totalorder %s33, 1
      %p46 = scmp.ne.s32.totalorder %s41, %s43
      %p47 = scmp.eq.s32.totalorder %s33, 0
      %p48 = por %p46, %p47
      %p49 = scmp.ne.s32.totalorder %s41, %s43
      %p50 = scmp.eq.s32.totalorder %s38, 1
      %p51 = por %p49, %p50
      %p52 = scmp.ne.s32.totalorder %s43, %s44
      %p53 = scmp.eq.s32.totalorder %s38, 0
      %p54 = por %p52, %p53
      %p55 = scmp.ne.s32.totalorder %s43, %s44
      %p56 = scmp.eq.s32.totalorder %s39, 1
      %p57 = por %p55, %p56
      %p59 = scmp.ne.s32.totalorder %s44, %s58
      %p60 = scmp.eq.s32.totalorder %s39, 0
      %p61 = por %p59, %p60
      %s62 = ssub.s32 %s33, %s40
      %p63 = scmp.eq.s32.totalorder %s62, 0
      %s65 = sadd.s32 %s64, 1
      %s66 = scalar_select %p63, %s64, %s65
      %p69 = pneg %p63
      %p70 = scmp.eq.s32.totalorder %s33, 1
      %p71 = por %p69, %p70
      %p72 = scmp.ne.s32.totalorder %s64, %s67
      %p73 = scmp.eq.s32.totalorder %s33, 0
      %p74 = por %p72, %p73
      %p75 = scmp.ne.s32.totalorder %s64, %s67
      %p76 = scmp.eq.s32.totalorder %s38, 1
      %p77 = por %p75, %p76
      %p78 = scmp.ne.s32.totalorder %s67, %s68
      %p79 = scmp.eq.s32.totalorder %s38, 0
      %p80 = por %p78, %p79
      %p81 = scmp.ne.s32.totalorder %s67, %s68
      %p82 = scmp.eq.s32.totalorder %s39, 1
      %p83 = por %p81, %p82
      %p85 = scmp.ne.s32.totalorder %s68, %s84
      %p86 = scmp.eq.s32.totalorder %s39, 0
      %p87 = por %p85, %p86
      %s89 = sadd.s32 %s88, 1
      %p92 = scmp.eq.s32.totalorder %s33, 1
      %p93 = scmp.ne.s32.totalorder %s88, %s90
      %p94 = scmp.eq.s32.totalorder %s33, 0
      %p95 = por %p93, %p94
      %p96 = scmp.ne.s32.totalorder %s88, %s90
      %p97 = scmp.eq.s32.totalorder %s38, 1
      %p98 = por %p96, %p97
      %p99 = scmp.ne.s32.totalorder %s90, %s91
      %p100 = scmp.eq.s32.totalorder %s38, 0
      %p101 = por %p99, %p100
      %p102 = scmp.ne.s32.totalorder %s90, %s91
      %p103 = scmp.eq.s32.totalorder %s39, 1
      %p104 = por %p102, %p103
      %p106 = scmp.ne.s32.totalorder %s91, %s105
      %p107 = scmp.eq.s32.totalorder %s39, 0
      %p108 = por %p106, %p107
      %s110 = sadd.s32 %s109, 1
      %p113 = scmp.eq.s32.totalorder %s33, 1
      %p114 = scmp.ne.s32.totalorder %s109, %s111
      %p115 = scmp.eq.s32.totalorder %s33, 0
      %p116 = por %p114, %p115
      %p117 = scmp.ne.s32.totalorder %s109, %s111
      %p118 = scmp.eq.s32.totalorder %s38, 1
      %p119 = por %p117, %p118
      %p120 = scmp.ne.s32.totalorder %s111, %s112
      %p121 = scmp.eq.s32.totalorder %s38, 0
      %p122 = por %p120, %p121
      %p123 = scmp.ne.s32.totalorder %s111, %s112
      %p124 = scmp.eq.s32.totalorder %s39, 1
      %p125 = por %p123, %p124
      %p127 = scmp.ne.s32.totalorder %s112, %s126
      %p128 = scmp.eq.s32.totalorder %s39, 0
      %p129 = por %p127, %p128
      %s131 = sadd.s32 %s130, 1
      %p134 = scmp.eq.s32.totalorder %s33, 1
      %p135 = scmp.ne.s32.totalorder %s130, %s132
      %p136 = scmp.eq.s32.totalorder %s33, 0
      %p137 = por %p135, %p136
      %p138 = scmp.ne.s32.totalorder %s130, %s132
      %p139 = scmp.eq.s32.totalorder %s38, 1
      %p140 = por %p138, %p139
      %p141 = scmp.ne.s32.totalorder %s132, %s133
      %p142 = scmp.eq.s32.totalorder %s38, 0
      %p143 = por %p141, %p142
      %p144 = scmp.ne.s32.totalorder %s132, %s133
      %p145 = scmp.eq.s32.totalorder %s39, 1
      %p146 = por %p144, %p145
      %p148 = scmp.ne.s32.totalorder %s133, %s147
      %p149 = scmp.eq.s32.totalorder %s39, 0
      %p150 = por %p148, %p149
      %s152 = sadd.s32 %s151, 1
      %p155 = scmp.eq.s32.totalorder %s33, 1
      %p156 = scmp.ne.s32.totalorder %s151, %s153
      %p157 = scmp.eq.s32.totalorder %s33, 0
      %p158 = por %p156, %p157
      %p159 = scmp.ne.s32.totalorder %s151, %s153
      %p160 = scmp.eq.s32.totalorder %s38, 1
      %p161 = por %p159, %p160
      %p162 = scmp.ne.s32.totalorder %s153, %s154
      %p163 = scmp.eq.s32.totalorder %s38, 0
      %p164 = por %p162, %p163
      %p165 = scmp.ne.s32.totalorder %s153, %s154
      %p166 = scmp.eq.s32.totalorder %s39, 1
      %p167 = por %p165, %p166
      %p169 = scmp.ne.s32.totalorder %s154, %s168
      %p170 = scmp.eq.s32.totalorder %s39, 0
      %p171 = por %p169, %p170
      %s173 = sadd.s32 %s172, 1
      %p176 = scmp.eq.s32.totalorder %s33, 1
      %p177 = scmp.ne.s32.totalorder %s172, %s174
      %p178 = scmp.eq.s32.totalorder %s33, 0
      %p179 = por %p177, %p178
      %p180 = scmp.ne.s32.totalorder %s172, %s174
      %p181 = scmp.eq.s32.totalorder %s38, 1
      %p182 = por %p180, %p181
      %p183 = scmp.ne.s32.totalorder %s174, %s175
      %p184 = scmp.eq.s32.totalorder %s38, 0
      %p185 = por %p183, %p184
      %p186 = scmp.ne.s32.totalorder %s174, %s175
      %p187 = scmp.eq.s32.totalorder %s39, 1
      %p188 = por %p186, %p187
      %p190 = scmp.ne.s32.totalorder %s175, %s189
      %p191 = scmp.eq.s32.totalorder %s39, 0
      %p192 = por %p190, %p191
      %s194 = sadd.s32 %s193, 1
      %p197 = scmp.eq.s32.totalorder %s33, 1
      %p198 = scmp.ne.s32.totalorder %s193, %s195
      %p199 = scmp.eq.s32.totalorder %s33, 0
      %p200 = por %p198, %p199
      %p201 = scmp.ne.s32.totalorder %s193, %s195
      %p202 = scmp.eq.s32.totalorder %s38, 1
      %p203 = por %p201, %p202
      %p204 = scmp.ne.s32.totalorder %s195, %s196
      %p205 = scmp.eq.s32.totalorder %s38, 0
      %p206 = por %p204, %p205
      %p207 = scmp.ne.s32.totalorder %s195, %s196
      %p208 = scmp.eq.s32.totalorder %s39, 1
      %p209 = por %p207, %p208
      %p211 = scmp.ne.s32.totalorder %s196, %s210
      %p212 = scmp.eq.s32.totalorder %s39, 0
      %p213 = por %p211, %p212
      %s214 = ssub.s32 %s33, %s40
      %p215 = scmp.eq.s32.totalorder %s214, 0
      %s217 = sadd.s32 %s216, 1
      %s218 = scalar_select %p215, %s216, %s217
      %p221 = pneg %p215
      %p222 = scmp.eq.s32.totalorder %s33, 1
      %p223 = por %p221, %p222
      %p224 = scmp.ne.s32.totalorder %s216, %s219
      %p225 = scmp.eq.s32.totalorder %s33, 0
      %p226 = por %p224, %p225
      %p227 = scmp.ne.s32.totalorder %s216, %s219
      %p228 = scmp.eq.s32.totalorder %s38, 1
      %p229 = por %p227, %p228
      %p230 = scmp.ne.s32.totalorder %s219, %s220
      %p231 = scmp.eq.s32.totalorder %s38, 0
      %p232 = por %p230, %p231
      %p233 = scmp.ne.s32.totalorder %s219, %s220
      %p234 = scmp.eq.s32.totalorder %s39, 1
      %p235 = por %p233, %p234
      %p237 = scmp.ne.s32.totalorder %s220, %s236
      %p238 = scmp.eq.s32.totalorder %s39, 0
      %p239 = por %p237, %p238
      %s240 = ssub.s32 %s33, %s40
      %p241 = scmp.eq.s32.totalorder %s240, 0
      %s243 = sadd.s32 %s242, 1
      %s244 = scalar_select %p241, %s242, %s243
      %p247 = pneg %p241
      %p248 = scmp.eq.s32.totalorder %s33, 1
      %p249 = por %p247, %p248
      %p250 = scmp.ne.s32.totalorder %s242, %s245
      %p251 = scmp.eq.s32.totalorder %s33, 0
      %p252 = por %p250, %p251
      %p253 = scmp.ne.s32.totalorder %s242, %s245
      %p254 = scmp.eq.s32.totalorder %s38, 1
      %p255 = por %p253, %p254
      %p256 = scmp.ne.s32.totalorder %s245, %s246
      %p257 = scmp.eq.s32.totalorder %s38, 0
      %p258 = por %p256, %p257
      %p259 = scmp.ne.s32.totalorder %s245, %s246
      %p260 = scmp.eq.s32.totalorder %s39, 1
      %p261 = por %p259, %p260
      %p263 = scmp.ne.s32.totalorder %s246, %s262
      %p264 = scmp.eq.s32.totalorder %s39, 0
      %p265 = por %p263, %p264
      %s266 = ssub.s32 %s33, %s40
      %p267 = scmp.eq.s32.totalorder %s266, 0
      %s269 = sadd.s32 %s268, 1
      %s270 = scalar_select %p267, %s268, %s269
      %p273 = pneg %p267
      %p274 = scmp.eq.s32.totalorder %s33, 1
      %p275 = por %p273, %p274
      %p276 = scmp.ne.s32.totalorder %s268, %s271
      %p277 = scmp.eq.s32.totalorder %s33, 0
      %p278 = por %p276, %p277
      %p279 = scmp.ne.s32.totalorder %s268, %s271
      %p280 = scmp.eq.s32.totalorder %s38, 1
      %p281 = por %p279, %p280
      %p282 = scmp.ne.s32.totalorder %s271, %s272
      %p283 = scmp.eq.s32.totalorder %s38, 0
      %p284 = por %p282, %p283
      %p285 = scmp.ne.s32.totalorder %s271, %s272
      %p286 = scmp.eq.s32.totalorder %s39, 1
      %p287 = por %p285, %p286
      %p289 = scmp.ne.s32.totalorder %s272, %s288
      %p290 = scmp.eq.s32.totalorder %s39, 0
      %p291 = por %p289, %p290
      %p292 = scmp.le.s32.totalorder 1, %s33
      %p293 = scmp.lt.s32.totalorder %s33, 3
      %p294 = pnand %p292, %p293
      %p295 = pneg %p294
      // Predicated region
      $region9: #{tpu_custom_call.1} parent=5 // pred_check
        _
      $region10: #{tpu_custom_call.1} parent=5 // pred_check_branch
        %297 = sbr.rel (%p294) target = $region12
      $region11: #{tpu_custom_call.1} parent=5 // pred_region
        %s298 = ssub.s32 %s33, 1
        // Predicated region
        $region13: #{tpu_custom_call.1} parent=11 // pred_check
          %p299 = pneg %p54
        $region14: #{tpu_custom_call.1} parent=11 // pred_check_branch
          %301 = sbr.rel (%p299) target = $region16
        $region15: #{tpu_custom_call.1} parent=11 // pred_region
          _
        $region16: #{tpu_custom_call.1} parent=11 // pred_fallthru
          _
        // Predicated region
        $region17: #{tpu_custom_call.1} parent=11 // pred_check
          %p302 = pneg %p101
        $region18: #{tpu_custom_call.1} parent=11 // pred_check_branch
          %304 = sbr.rel (%p302) target = $region20
        $region19: #{tpu_custom_call.1} parent=11 // pred_region
          %s306 = ssub.s32 1024, 1024
          %307 = vsyncadd [#allocation7], %s306
          %s308 = sshll.u32 [#allocation6], 4
          %s309 = int_to_ptr.vmem [resolvable:$true] %s308
          %314 = dma.hbm_to_vmem [thread:$0]  %s2, 1024, %s309, [#allocation7], 64, 64, 4
        $region20: #{tpu_custom_call.1} parent=11 // pred_fallthru
          _
        // Predicated region
        $region21: #{tpu_custom_call.1} parent=11 // pred_check
          %p315 = pneg %p122
        $region22: #{tpu_custom_call.1} parent=11 // pred_check_branch
          %317 = sbr.rel (%p315) target = $region24
        $region23: #{tpu_custom_call.1} parent=11 // pred_region
          %s319 = ssub.s32 16, 16
          %320 = vsyncadd [#allocation7], %s319
          %s322 = sshll.u32 [#allocation8], 4
          %s323 = int_to_ptr.vmem [resolvable:$true] %s322
          %325 = dma.hbm_to_vmem [thread:$0]  %s3, 16, %s323, [#allocation7]
        $region24: #{tpu_custom_call.1} parent=11 // pred_fallthru
          _
        // Predicated region
        $region25: #{tpu_custom_call.1} parent=11 // pred_check
          %p326 = pneg %p143
        $region26: #{tpu_custom_call.1} parent=11 // pred_check_branch
          %328 = sbr.rel (%p326) target = $region28
        $region27: #{tpu_custom_call.1} parent=11 // pred_region
          %s330 = ssub.s32 1024, 1024
          %331 = vsyncadd [#allocation10], %s330
          %s332 = sshll.u32 [#allocation9], 4
          %s333 = int_to_ptr.vmem [resolvable:$true] %s332
          %338 = dma.hbm_to_vmem [thread:$0]  %s4, 1024, %s333, [#allocation10], 64, 64, 4
        $region28: #{tpu_custom_call.1} parent=11 // pred_fallthru
          _
        // Predicated region
        $region29: #{tpu_custom_call.1} parent=11 // pred_check
          %p339 = pneg %p164
        $region30: #{tpu_custom_call.1} parent=11 // pred_check_branch
          %341 = sbr.rel (%p339) target = $region32
        $region31: #{tpu_custom_call.1} parent=11 // pred_region
          %s343 = ssub.s32 16, 16
          %344 = vsyncadd [#allocation10], %s343
          %s346 = sshll.u32 [#allocation11], 4
          %s347 = int_to_ptr.vmem [resolvable:$true] %s346
          %349 = dma.hbm_to_vmem [thread:$0]  %s5, 16, %s347, [#allocation10]
        $region32: #{tpu_custom_call.1} parent=11 // pred_fallthru
          _
        // Predicated region
        $region33: #{tpu_custom_call.1} parent=11 // pred_check
          %p350 = pneg %p185
        $region34: #{tpu_custom_call.1} parent=11 // pred_check_branch
          %352 = sbr.rel (%p350) target = $region36
        $region35: #{tpu_custom_call.1} parent=11 // pred_region
          %s354 = ssub.s32 1024, 1024
          %355 = vsyncadd [#allocation13], %s354
          %s356 = sshll.u32 [#allocation12], 4
          %s357 = int_to_ptr.vmem [resolvable:$true] %s356
          %362 = dma.hbm_to_vmem [thread:$0]  %s6, 1024, %s357, [#allocation13], 64, 64, 4
        $region36: #{tpu_custom_call.1} parent=11 // pred_fallthru
          _
        // Predicated region
        $region37: #{tpu_custom_call.1} parent=11 // pred_check
          %p363 = pneg %p206
        $region38: #{tpu_custom_call.1} parent=11 // pred_check_branch
          %365 = sbr.rel (%p363) target = $region40
        $region39: #{tpu_custom_call.1} parent=11 // pred_region
          %s367 = ssub.s32 16, 16
          %368 = vsyncadd [#allocation13], %s367
          %s370 = sshll.u32 [#allocation14], 4
          %s371 = int_to_ptr.vmem [resolvable:$true] %s370
          %373 = dma.hbm_to_vmem [thread:$0]  %s7, 16, %s371, [#allocation13]
        $region40: #{tpu_custom_call.1} parent=11 // pred_fallthru
          _
      $region12: #{tpu_custom_call.1} parent=5 // pred_fallthru
        _
      %p374 = scmp.lt.s32.totalorder %s33, 2
      // Predicated region
      $region41: #{tpu_custom_call.1} parent=5 // pred_check
        %p375 = pneg %p374
      $region42: #{tpu_custom_call.1} parent=5 // pred_check_branch
        %377 = sbr.rel (%p375) target = $region44
      $region43: #{tpu_custom_call.1} parent=5 // pred_region
        // Predicated region
        $region45: #{tpu_custom_call.1} parent=43 // pred_check
          %p378 = pneg %p74
        $region46: #{tpu_custom_call.1} parent=43 // pred_check_branch
          %380 = sbr.rel (%p378) target = $region48
        $region47: #{tpu_custom_call.1} parent=43 // pred_region
          %s381 = sand.u32 %s64, 1
          %s382 = scalar_lea.sflag [#allocation4], %s381
          %s383 = sand.u32 %s64, 1
          %s384 = smul.addr %s383, 64
          %s385 = scalar_lea.vmem [#allocation3], %s384
          %s386 = smul.u32 16, %s33
          %s388 = ssub.s32 1024, 1024
          %389 = vsyncadd %s382, %s388
          %s390 = smul.addr %s386, 64
          %s391 = scalar_lea.hbm %s1, %s390
          %s392 = sshll.u32 %s385, 4
          %s393 = int_to_ptr.vmem [resolvable:$true] %s392
          %398 = dma.hbm_to_vmem [thread:$0]  %s391, 1024, %s393, %s382, 64, 64, 4
        $region48: #{tpu_custom_call.1} parent=43 // pred_fallthru
          _
        // Predicated region
        $region49: #{tpu_custom_call.1} parent=43 // pred_check
          %p399 = pneg %p226
        $region50: #{tpu_custom_call.1} parent=43 // pred_check_branch
          %401 = sbr.rel (%p399) target = $region52
        $region51: #{tpu_custom_call.1} parent=43 // pred_region
          %s402 = sand.u32 %s216, 1
          %s403 = scalar_lea.sflag [#allocation16], %s402
          %s404 = sand.u32 %s216, 1
          %s405 = smul.addr %s404, 128
          %s406 = scalar_lea.vmem [#allocation15], %s405
          %s407 = smul.u32 16, %s33
          %s409 = ssub.s32 2048, 2048
          %410 = vsyncadd %s403, %s409
          %s411 = smul.addr %s407, 128
          %s412 = scalar_lea.hbm %s8, %s411
          %s413 = sshll.u32 %s406, 4
          %s414 = int_to_ptr.vmem [resolvable:$true] %s413
          %419 = dma.hbm_to_vmem [thread:$0]  %s412, 2048, %s414, %s403, 128, 128, 8
        $region52: #{tpu_custom_call.1} parent=43 // pred_fallthru
          _
      $region44: #{tpu_custom_call.1} parent=5 // pred_fallthru
        _
      %p420 = scmp.le.s32.totalorder 1, %s33
      %p421 = scmp.lt.s32.totalorder %s33, 3
      %p422 = pnand %p420, %p421
      %p423 = pneg %p422
      // Predicated region
      $region53: #{tpu_custom_call.1} parent=5 // pred_check
        _
      $region54: #{tpu_custom_call.1} parent=5 // pred_check_branch
        %425 = sbr.rel (%p422) target = $region56
      $region55: #{tpu_custom_call.1} parent=5 // pred_region
        %s426 = ssub.s32 %s33, 1
        %s427 = sand.u32 %s67, 1
        %s428 = scalar_lea.sflag [#allocation4], %s427
        %s429 = sand.u32 %s67, 1
        %s430 = smul.addr %s429, 64
        %s431 = scalar_lea.vmem [#allocation3], %s430
        // Predicated region
        $region57: #{tpu_custom_call.1} parent=55 // pred_check
          %p432 = pneg %p80
        $region58: #{tpu_custom_call.1} parent=55 // pred_check_branch
          %434 = sbr.rel (%p432) target = $region60
        $region59: #{tpu_custom_call.1} parent=55 // pred_region
          %435 = dma.done %s428, 1024
        $region60: #{tpu_custom_call.1} parent=55 // pred_fallthru
          _
        // Predicated region
        $region61: #{tpu_custom_call.1} parent=55 // pred_check
          %p436 = pneg %p101
        $region62: #{tpu_custom_call.1} parent=55 // pred_check_branch
          %438 = sbr.rel (%p436) target = $region64
        $region63: #{tpu_custom_call.1} parent=55 // pred_region
          %439 = dma.done [#allocation7], 1024
        $region64: #{tpu_custom_call.1} parent=55 // pred_fallthru
          _
        // Predicated region
        $region65: #{tpu_custom_call.1} parent=55 // pred_check
          %p440 = pneg %p122
        $region66: #{tpu_custom_call.1} parent=55 // pred_check_branch
          %442 = sbr.rel (%p440) target = $region68
        $region67: #{tpu_custom_call.1} parent=55 // pred_region
          %443 = dma.done [#allocation7], 16
        $region68: #{tpu_custom_call.1} parent=55 // pred_fallthru
          _
        // Predicated region
        $region69: #{tpu_custom_call.1} parent=55 // pred_check
          %p444 = pneg %p143
        $region70: #{tpu_custom_call.1} parent=55 // pred_check_branch
          %446 = sbr.rel (%p444) target = $region72
        $region71: #{tpu_custom_call.1} parent=55 // pred_region
          %447 = dma.done [#allocation10], 1024
        $region72: #{tpu_custom_call.1} parent=55 // pred_fallthru
          _
        // Predicated region
        $region73: #{tpu_custom_call.1} parent=55 // pred_check
          %p448 = pneg %p164
        $region74: #{tpu_custom_call.1} parent=55 // pred_check_branch
          %450 = sbr.rel (%p448) target = $region76
        $region75: #{tpu_custom_call.1} parent=55 // pred_region
          %451 = dma.done [#allocation10], 16
        $region76: #{tpu_custom_call.1} parent=55 // pred_fallthru
          _
        // Predicated region
        $region77: #{tpu_custom_call.1} parent=55 // pred_check
          %p452 = pneg %p185
        $region78: #{tpu_custom_call.1} parent=55 // pred_check_branch
          %454 = sbr.rel (%p452) target = $region80
        $region79: #{tpu_custom_call.1} parent=55 // pred_region
          %455 = dma.done [#allocation13], 1024
        $region80: #{tpu_custom_call.1} parent=55 // pred_fallthru
          _
        // Predicated region
        $region81: #{tpu_custom_call.1} parent=55 // pred_check
          %p456 = pneg %p206
        $region82: #{tpu_custom_call.1} parent=55 // pred_check_branch
          %458 = sbr.rel (%p456) target = $region84
        $region83: #{tpu_custom_call.1} parent=55 // pred_region
          %459 = dma.done [#allocation13], 16
        $region84: #{tpu_custom_call.1} parent=55 // pred_fallthru
          _
        %s460 = sand.u32 %s219, 1
        %s461 = scalar_lea.sflag [#allocation16], %s460
        %s462 = sand.u32 %s219, 1
        %s463 = smul.addr %s462, 128
        %s464 = scalar_lea.vmem [#allocation15], %s463
        // Predicated region
        $region85: #{tpu_custom_call.1} parent=55 // pred_check
          %p465 = pneg %p232
        $region86: #{tpu_custom_call.1} parent=55 // pred_check_branch
          %467 = sbr.rel (%p465) target = $region88
        $region87: #{tpu_custom_call.1} parent=55 // pred_region
          %468 = dma.done %s461, 2048
        $region88: #{tpu_custom_call.1} parent=55 // pred_fallthru
          _
        %p469 = pneg %p54
        %p470 = pneg %p51
        %s471 = sand.u32 %s67, 1
        %s472 = scalar_lea.sflag [#allocation4], %s471
        %s473 = sand.u32 %s67, 1
        %s474 = smul.addr %s473, 64
        %s475 = scalar_lea.vmem [#allocation3], %s474
        %p476 = pneg %p80
        %p477 = pneg %p77
        %p478 = pneg %p101
        %p479 = pneg %p98
        %p480 = pneg %p122
        %p481 = pneg %p119
        %p482 = pneg %p143
        %p483 = pneg %p140
        %p484 = pneg %p164
        %p485 = pneg %p161
        %p486 = pneg %p185
        %p487 = pneg %p182
        %p488 = pneg %p206
        %p489 = pneg %p203
        %s490 = sand.u32 %s219, 1
        %s491 = scalar_lea.sflag [#allocation16], %s490
        %s492 = sand.u32 %s219, 1
        %s493 = smul.addr %s492, 128
        %s494 = scalar_lea.vmem [#allocation15], %s493
        %p495 = pneg %p232
        %p496 = pneg %p229
        %p497 = pneg %p258
        %p498 = pneg %p255
        %s499 = sand.u32 %s245, 1
        %s500 = scalar_lea.sflag [#allocation5], %s499
        %s501 = sand.u32 %s245, 1
        %s502 = smul.addr %s501, 128
        %s503 = scalar_lea.vmem [#allocation17], %s502
        %p504 = pneg %p284
        %p505 = pneg %p281
        %s506 = sand.u32 %s271, 1
        %s507 = scalar_lea.sflag [#allocation19], %s506
        %s508 = sand.u32 %s271, 1
        %s509 = smul.addr %s508, 64
        %s510 = scalar_lea.vmem [#allocation18], %s509
        %s511 = smul.u32 16, %s38
        %s512 = smul.u32 16, %s38
        %s513 = smul.u32 16, %s38
        %s514 = smul.u32 16, %s38
        %v516 = vld [vmem:[%s431] sm:$0xf]
        %v517 = vld [vmem:[%s431 + $0x4] sm:$0xf]
        %v518 = vld [vmem:[%s431 + $0x8] sm:$0xf]
        %v519 = vld [vmem:[%s431 + $0xc] sm:$0xf]
        %v520 = vld [vmem:[%s431 + $0x10] sm:$0xf]
        %v521 = vld [vmem:[%s431 + $0x14] sm:$0xf]
        %v522 = vld [vmem:[%s431 + $0x18] sm:$0xf]
        %v523 = vld [vmem:[%s431 + $0x1c] sm:$0xf]
        %v524 = vld [vmem:[%s431 + $0x20] sm:$0xf]
        %v525 = vld [vmem:[%s431 + $0x24] sm:$0xf]
        %v526 = vld [vmem:[%s431 + $0x28] sm:$0xf]
        %v527 = vld [vmem:[%s431 + $0x2c] sm:$0xf]
        %v528 = vld [vmem:[%s431 + $0x30] sm:$0xf]
        %v529 = vld [vmem:[%s431 + $0x34] sm:$0xf]
        %v530 = vld [vmem:[%s431 + $0x38] sm:$0xf]
        %v531 = vld [vmem:[%s431 + $0x3c] sm:$0xf]
        %v532 = vld [vmem:[#allocation6] sm:$0xf]
        %v533 = vld [vmem:[#allocation6 + $0x4] sm:$0xf]
        %v534 = vld [vmem:[#allocation6 + $0x8] sm:$0xf]
        %v535 = vld [vmem:[#allocation6 + $0xc] sm:$0xf]
        %v536 = vld [vmem:[#allocation6 + $0x10] sm:$0xf]
        %v537 = vld [vmem:[#allocation6 + $0x14] sm:$0xf]
        %v538 = vld [vmem:[#allocation6 + $0x18] sm:$0xf]
        %v539 = vld [vmem:[#allocation6 + $0x1c] sm:$0xf]
        %v540 = vld [vmem:[#allocation6 + $0x20] sm:$0xf]
        %v541 = vld [vmem:[#allocation6 + $0x24] sm:$0xf]
        %v542 = vld [vmem:[#allocation6 + $0x28] sm:$0xf]
        %v543 = vld [vmem:[#allocation6 + $0x2c] sm:$0xf]
        %v544 = vld [vmem:[#allocation6 + $0x30] sm:$0xf]
        %v545 = vld [vmem:[#allocation6 + $0x34] sm:$0xf]
        %v546 = vld [vmem:[#allocation6 + $0x38] sm:$0xf]
        %v547 = vld [vmem:[#allocation6 + $0x3c] sm:$0xf]
        %v548 = vld [vmem:[#allocation8] sm:$0x1]
        %v550 = vlaneseq
        %v551 = vshrl.u32 %v550, 7
        %v552 = vsub.s32 0, %v551
        %v553 = vrot.slane %v548, %v552
        %v571 = vunpack.c.l.b16 %v516
        %v572 = vunpack.c.l.b16 %v517
        %v573 = vunpack.c.l.b16 %v518
        %v574 = vunpack.c.l.b16 %v519
        %v575 = vunpack.c.l.b16 %v520
        %v576 = vunpack.c.l.b16 %v521
        %v577 = vunpack.c.l.b16 %v522
        %v578 = vunpack.c.l.b16 %v523
        %v579 = vunpack.c.l.b16 %v524
        %v580 = vunpack.c.l.b16 %v525
        %v581 = vunpack.c.l.b16 %v526
        %v582 = vunpack.c.l.b16 %v527
        %v583 = vunpack.c.l.b16 %v528
        %v584 = vunpack.c.l.b16 %v529
        %v585 = vunpack.c.l.b16 %v530
        %v586 = vunpack.c.l.b16 %v531
        %v587 = vpack.c.b16 %v572, %v571
        %v588 = vpack.c.b16 %v574, %v573
        %v589 = vpack.c.b16 %v576, %v575
        %v590 = vpack.c.b16 %v578, %v577
        %v591 = vpack.c.b16 %v580, %v579
        %v592 = vpack.c.b16 %v582, %v581
        %v593 = vpack.c.b16 %v584, %v583
        %v594 = vpack.c.b16 %v586, %v585
        %v619 = vunpack.c.l.b16 %v532
        %v620 = vunpack.c.l.b16 %v533
        %v621 = vunpack.c.l.b16 %v534
        %v622 = vunpack.c.l.b16 %v535
        %v623 = vunpack.c.l.b16 %v536
        %v624 = vunpack.c.l.b16 %v537
        %v625 = vunpack.c.l.b16 %v538
        %v626 = vunpack.c.l.b16 %v539
        %v627 = vunpack.c.l.b16 %v540
        %v628 = vunpack.c.l.b16 %v541
        %v629 = vunpack.c.l.b16 %v542
        %v630 = vunpack.c.l.b16 %v543
        %v631 = vunpack.c.l.b16 %v544
        %v632 = vunpack.c.l.b16 %v545
        %v633 = vunpack.c.l.b16 %v546
        %v634 = vunpack.c.l.b16 %v547
        %v635 = vpack.c.b16 %v620, %v619
        %v636 = vpack.c.b16 %v622, %v621
        %v637 = vpack.c.b16 %v624, %v623
        %v638 = vpack.c.b16 %v626, %v625
        %v639 = vpack.c.b16 %v628, %v627
        %v640 = vpack.c.b16 %v630, %v629
        %v641 = vpack.c.b16 %v632, %v631
        %v642 = vpack.c.b16 %v634, %v633
        %651 = vmatprep.subr.bf16.mxu0 0
        %652 = vmatpush1.bf16.msra.mxu0 %v635
        %653 = vmatprep.subr.bf16.mxu0 0
        %654 = vmatpush1.bf16.msra.mxu0 %v636
        %655 = vmatprep.subr.bf16.mxu0 0
        %656 = vmatpush1.bf16.msra.mxu0 %v637
        %657 = vmatprep.subr.bf16.mxu0 0
        %658 = vmatpush1.bf16.msra.mxu0 %v638
        %659 = vmatprep.subr.bf16.mxu0 0
        %660 = vmatpush1.bf16.msra.mxu0 %v639
        %661 = vmatprep.subr.bf16.mxu0 0
        %662 = vmatpush1.bf16.msra.mxu0 %v640
        %663 = vmatprep.subr.bf16.mxu0 0
        %664 = vmatpush1.bf16.msra.mxu0 %v641
        %665 = vmatprep.subr.bf16.mxu0 0
        %666 = vmatpush1.bf16.msra.mxu0 %v642
        %667 = vmatprep.subr.bf16.mxu0 0
        %668 = vmatpush1.bf16.msra.mxu0 0
        %669 = vmatprep.subr.bf16.mxu0 0
        %670 = vmatpush1.bf16.msra.mxu0 0
        %671 = vmatprep.subr.bf16.mxu0 0
        %672 = vmatpush1.bf16.msra.mxu0 0
        %673 = vmatprep.subr.bf16.mxu0 0
        %674 = vmatpush1.bf16.msra.mxu0 0
        %675 = vmatprep.subr.bf16.mxu0 0
        %676 = vmatpush1.bf16.msra.mxu0 0
        %677 = vmatprep.subr.bf16.mxu0 0
        %678 = vmatpush1.bf16.msra.mxu0 0
        %679 = vmatprep.subr.bf16.mxu0 0
        %680 = vmatpush1.bf16.msra.mxu0 0
        %681 = vmatprep.subr.bf16.mxu0 0
        %682 = vmatpush1.bf16.msra.mxu0 0
        %683 = vmatprep.mubr.bf16.mxu0 0
        %684 = vmatmul.mubr.bf16.gmra.mrb[0].mxu0 %v587
        %v685 = vpop.f32.mrb[0].mxu0
        %v686 = vadd.f32 %v553, %v685
        %v687 = vpop.f32.mrb[0].mxu0
        %v688 = vpop.f32.mrb[0].mxu0
        %v689 = vadd.f32 %v553, %v688
        %v690 = vpop.f32.mrb[0].mxu0
        %691 = vmatprep.mubr.bf16.mxu0 0
        %692 = vmatmul.mubr.bf16.gmra.mrb[0].mxu0 %v588
        %v693 = vpop.f32.mrb[0].mxu0
        %v694 = vadd.f32 %v553, %v693
        %v695 = vpop.f32.mrb[0].mxu0
        %v696 = vpop.f32.mrb[0].mxu0
        %v697 = vadd.f32 %v553, %v696
        %v698 = vpop.f32.mrb[0].mxu0
        %699 = vmatprep.mubr.bf16.mxu0 0
        %700 = vmatmul.mubr.bf16.gmra.mrb[0].mxu0 %v589
        %v701 = vpop.f32.mrb[0].mxu0
        %v702 = vadd.f32 %v553, %v701
        %v703 = vpop.f32.mrb[0].mxu0
        %v704 = vpop.f32.mrb[0].mxu0
        %v705 = vadd.f32 %v553, %v704
        %v706 = vpop.f32.mrb[0].mxu0
        %707 = vmatprep.mubr.bf16.mxu0 0
        %708 = vmatmul.mubr.bf16.gmra.mrb[0].mxu0 %v590
        %v709 = vpop.f32.mrb[0].mxu0
        %v710 = vadd.f32 %v553, %v709
        %v711 = vpop.f32.mrb[0].mxu0
        %v712 = vpop.f32.mrb[0].mxu0
        %v713 = vadd.f32 %v553, %v712
        %v714 = vpop.f32.mrb[0].mxu0
        %715 = vmatprep.mubr.bf16.mxu0 0
        %716 = vmatmul.mubr.bf16.gmra.mrb[0].mxu0 %v591
        %v717 = vpop.f32.mrb[0].mxu0
        %v718 = vadd.f32 %v553, %v717
        %v719 = vpop.f32.mrb[0].mxu0
        %v720 = vpop.f32.mrb[0].mxu0
        %v721 = vadd.f32 %v553, %v720
        %v722 = vpop.f32.mrb[0].mxu0
        %723 = vmatprep.mubr.bf16.mxu0 0
        %724 = vmatmul.mubr.bf16.gmra.mrb[0].mxu0 %v592
        %v725 = vpop.f32.mrb[0].mxu0
        %v726 = vadd.f32 %v553, %v725
        %v727 = vpop.f32.mrb[0].mxu0
        %v728 = vpop.f32.mrb[0].mxu0
        %v729 = vadd.f32 %v553, %v728
        %v730 = vpop.f32.mrb[0].mxu0
        %731 = vmatprep.mubr.bf16.mxu0 0
        %732 = vmatmul.mubr.bf16.gmra.mrb[0].mxu0 %v593
        %v733 = vpop.f32.mrb[0].mxu0
        %v734 = vadd.f32 %v553, %v733
        %v735 = vpop.f32.mrb[0].mxu0
        %v736 = vpop.f32.mrb[0].mxu0
        %v737 = vadd.f32 %v553, %v736
        %v738 = vpop.f32.mrb[0].mxu0
        %739 = vmatprep.mubr.bf16.mxu0 0
        %740 = vmatmul.mubr.bf16.gmra.mrb[0].mxu0 %v594
        %v741 = vpop.f32.mrb[0].mxu0
        %v742 = vadd.f32 %v553, %v741
        %v743 = vpop.f32.mrb[0].mxu0
        %v744 = vpop.f32.mrb[0].mxu0
        %v745 = vadd.f32 %v553, %v744
        %v746 = vpop.f32.mrb[0].mxu0
        %747 = vdwg.mxu0
        %v748 = vmax.f32 %v686, 0.0
        %v749 = vmax.f32 %v689, 0.0
        %v750 = vmax.f32 %v694, 0.0
        %v751 = vmax.f32 %v697, 0.0
        %v752 = vmax.f32 %v702, 0.0
        %v753 = vmax.f32 %v705, 0.0
        %v754 = vmax.f32 %v710, 0.0
        %v755 = vmax.f32 %v713, 0.0
        %v756 = vmax.f32 %v718, 0.0
        %v757 = vmax.f32 %v721, 0.0
        %v758 = vmax.f32 %v726, 0.0
        %v759 = vmax.f32 %v729, 0.0
        %v760 = vmax.f32 %v734, 0.0
        %v761 = vmax.f32 %v737, 0.0
        %v762 = vmax.f32 %v742, 0.0
        %v763 = vmax.f32 %v745, 0.0
        %v764 = vpack.c.bf16 %v749, %v748
        %v765 = vpack.c.bf16 %v751, %v750
        %v766 = vpack.c.bf16 %v753, %v752
        %v767 = vpack.c.bf16 %v755, %v754
        %v768 = vpack.c.bf16 %v757, %v756
        %v769 = vpack.c.bf16 %v759, %v758
        %v770 = vpack.c.bf16 %v761, %v760
        %v771 = vpack.c.bf16 %v763, %v762
        %v772 = vld [vmem:[#allocation9] sm:$0xf]
        %v773 = vld [vmem:[#allocation9 + $0x4] sm:$0xf]
        %v774 = vld [vmem:[#allocation9 + $0x8] sm:$0xf]
        %v775 = vld [vmem:[#allocation9 + $0xc] sm:$0xf]
        %v776 = vld [vmem:[#allocation9 + $0x10] sm:$0xf]
        %v777 = vld [vmem:[#allocation9 + $0x14] sm:$0xf]
        %v778 = vld [vmem:[#allocation9 + $0x18] sm:$0xf]
        %v779 = vld [vmem:[#allocation9 + $0x1c] sm:$0xf]
        %v780 = vld [vmem:[#allocation9 + $0x20] sm:$0xf]
        %v781 = vld [vmem:[#allocation9 + $0x24] sm:$0xf]
        %v782 = vld [vmem:[#allocation9 + $0x28] sm:$0xf]
        %v783 = vld [vmem:[#allocation9 + $0x2c] sm:$0xf]
        %v784 = vld [vmem:[#allocation9 + $0x30] sm:$0xf]
        %v785 = vld [vmem:[#allocation9 + $0x34] sm:$0xf]
        %v786 = vld [vmem:[#allocation9 + $0x38] sm:$0xf]
        %v787 = vld [vmem:[#allocation9 + $0x3c] sm:$0xf]
        %v788 = vld [vmem:[#allocation11] sm:$0x1]
        %v790 = vlaneseq
        %v791 = vshrl.u32 %v790, 7
        %v792 = vsub.s32 0, %v791
        %v793 = vrot.slane %v788, %v792
        %v811 = vunpack.c.l.b16 %v772
        %v812 = vunpack.c.l.b16 %v773
        %v813 = vunpack.c.l.b16 %v774
        %v814 = vunpack.c.l.b16 %v775
        %v815 = vunpack.c.l.b16 %v776
        %v816 = vunpack.c.l.b16 %v777
        %v817 = vunpack.c.l.b16 %v778
        %v818 = vunpack.c.l.b16 %v779
        %v819 = vunpack.c.l.b16 %v780
        %v820 = vunpack.c.l.b16 %v781
        %v821 = vunpack.c.l.b16 %v782
        %v822 = vunpack.c.l.b16 %v783
        %v823 = vunpack.c.l.b16 %v784
        %v824 = vunpack.c.l.b16 %v785
        %v825 = vunpack.c.l.b16 %v786
        %v826 = vunpack.c.l.b16 %v787
        %v827 = vpack.c.b16 %v812, %v811
        %v828 = vpack.c.b16 %v814, %v813
        %v829 = vpack.c.b16 %v816, %v815
        %v830 = vpack.c.b16 %v818, %v817
        %v831 = vpack.c.b16 %v820, %v819
        %v832 = vpack.c.b16 %v822, %v821
        %v833 = vpack.c.b16 %v824, %v823
        %v834 = vpack.c.b16 %v826, %v825
        %843 = vmatprep.subr.bf16.mxu0 0
        %844 = vmatpush1.bf16.msra.mxu0 %v827
        %845 = vmatprep.subr.bf16.mxu0 0
        %846 = vmatpush1.bf16.msra.mxu0 %v828
        %847 = vmatprep.subr.bf16.mxu0 0
        %848 = vmatpush1.bf16.msra.mxu0 %v829
        %849 = vmatprep.subr.bf16.mxu0 0
        %850 = vmatpush1.bf16.msra.mxu0 %v830
        %851 = vmatprep.subr.bf16.mxu0 0
        %852 = vmatpush1.bf16.msra.mxu0 %v831
        %853 = vmatprep.subr.bf16.mxu0 0
        %854 = vmatpush1.bf16.msra.mxu0 %v832
        %855 = vmatprep.subr.bf16.mxu0 0
        %856 = vmatpush1.bf16.msra.mxu0 %v833
        %857 = vmatprep.subr.bf16.mxu0 0
        %858 = vmatpush1.bf16.msra.mxu0 %v834
        %859 = vmatprep.subr.bf16.mxu0 0
        %860 = vmatpush1.bf16.msra.mxu0 0
        %861 = vmatprep.subr.bf16.mxu0 0
        %862 = vmatpush1.bf16.msra.mxu0 0
        %863 = vmatprep.subr.bf16.mxu0 0
        %864 = vmatpush1.bf16.msra.mxu0 0
        %865 = vmatprep.subr.bf16.mxu0 0
        %866 = vmatpush1.bf16.msra.mxu0 0
        %867 = vmatprep.subr.bf16.mxu0 0
        %868 = vmatpush1.bf16.msra.mxu0 0
        %869 = vmatprep.subr.bf16.mxu0 0
        %870 = vmatpush1.bf16.msra.mxu0 0
        %871 = vmatprep.subr.bf16.mxu0 0
        %872 = vmatpush1.bf16.msra.mxu0 0
        %873 = vmatprep.subr.bf16.mxu0 0
        %874 = vmatpush1.bf16.msra.mxu0 0
        %875 = vmatprep.mubr.bf16.mxu0 0
        %876 = vmatmul.mubr.bf16.gmra.mrb[0].mxu0 %v764
        %v877 = vpop.f32.mrb[0].mxu0
        %v878 = vadd.f32 %v793, %v877
        %v879 = vpop.f32.mrb[0].mxu0
        %v880 = vpop.f32.mrb[0].mxu0
        %v881 = vadd.f32 %v793, %v880
        %v882 = vpop.f32.mrb[0].mxu0
        %883 = vmatprep.mubr.bf16.mxu0 0
        %884 = vmatmul.mubr.bf16.gmra.mrb[0].mxu0 %v765
        %v885 = vpop.f32.mrb[0].mxu0
        %v886 = vadd.f32 %v793, %v885
        %v887 = vpop.f32.mrb[0].mxu0
        %v888 = vpop.f32.mrb[0].mxu0
        %v889 = vadd.f32 %v793, %v888
        %v890 = vpop.f32.mrb[0].mxu0
        %891 = vmatprep.mubr.bf16.mxu0 0
        %892 = vmatmul.mubr.bf16.gmra.mrb[0].mxu0 %v766
        %v893 = vpop.f32.mrb[0].mxu0
        %v894 = vadd.f32 %v793, %v893
        %v895 = vpop.f32.mrb[0].mxu0
        %v896 = vpop.f32.mrb[0].mxu0
        %v897 = vadd.f32 %v793, %v896
        %v898 = vpop.f32.mrb[0].mxu0
        %899 = vmatprep.mubr.bf16.mxu0 0
        %900 = vmatmul.mubr.bf16.gmra.mrb[0].mxu0 %v767
        %v901 = vpop.f32.mrb[0].mxu0
        %v902 = vadd.f32 %v793, %v901
        %v903 = vpop.f32.mrb[0].mxu0
        %v904 = vpop.f32.mrb[0].mxu0
        %v905 = vadd.f32 %v793, %v904
        %v906 = vpop.f32.mrb[0].mxu0
        %907 = vmatprep.mubr.bf16.mxu0 0
        %908 = vmatmul.mubr.bf16.gmra.mrb[0].mxu0 %v768
        %v909 = vpop.f32.mrb[0].mxu0
        %v910 = vadd.f32 %v793, %v909
        %v911 = vpop.f32.mrb[0].mxu0
        %v912 = vpop.f32.mrb[0].mxu0
        %v913 = vadd.f32 %v793, %v912
        %v914 = vpop.f32.mrb[0].mxu0
        %915 = vmatprep.mubr.bf16.mxu0 0
        %916 = vmatmul.mubr.bf16.gmra.mrb[0].mxu0 %v769
        %v917 = vpop.f32.mrb[0].mxu0
        %v918 = vadd.f32 %v793, %v917
        %v919 = vpop.f32.mrb[0].mxu0
        %v920 = vpop.f32.mrb[0].mxu0
        %v921 = vadd.f32 %v793, %v920
        %v922 = vpop.f32.mrb[0].mxu0
        %923 = vmatprep.mubr.bf16.mxu0 0
        %924 = vmatmul.mubr.bf16.gmra.mrb[0].mxu0 %v770
        %v925 = vpop.f32.mrb[0].mxu0
        %v926 = vadd.f32 %v793, %v925
        %v927 = vpop.f32.mrb[0].mxu0
        %v928 = vpop.f32.mrb[0].mxu0
        %v929 = vadd.f32 %v793, %v928
        %v930 = vpop.f32.mrb[0].mxu0
        %931 = vmatprep.mubr.bf16.mxu0 0
        %932 = vmatmul.mubr.bf16.gmra.mrb[0].mxu0 %v771
        %v933 = vpop.f32.mrb[0].mxu0
        %v934 = vadd.f32 %v793, %v933
        %v935 = vpop.f32.mrb[0].mxu0
        %v936 = vpop.f32.mrb[0].mxu0
        %v937 = vadd.f32 %v793, %v936
        %v938 = vpop.f32.mrb[0].mxu0
        %939 = vdwg.mxu0
        %v940 = vmax.f32 %v878, 0.0
        %v941 = vmax.f32 %v881, 0.0
        %v942 = vmax.f32 %v886, 0.0
        %v943 = vmax.f32 %v889, 0.0
        %v944 = vmax.f32 %v894, 0.0
        %v945 = vmax.f32 %v897, 0.0
        %v946 = vmax.f32 %v902, 0.0
        %v947 = vmax.f32 %v905, 0.0
        %v948 = vmax.f32 %v910, 0.0
        %v949 = vmax.f32 %v913, 0.0
        %v950 = vmax.f32 %v918, 0.0
        %v951 = vmax.f32 %v921, 0.0
        %v952 = vmax.f32 %v926, 0.0
        %v953 = vmax.f32 %v929, 0.0
        %v954 = vmax.f32 %v934, 0.0
        %v955 = vmax.f32 %v937, 0.0
        %v956 = vpack.c.bf16 %v941, %v940
        %v957 = vpack.c.bf16 %v943, %v942
        %v958 = vpack.c.bf16 %v945, %v944
        %v959 = vpack.c.bf16 %v947, %v946
        %v960 = vpack.c.bf16 %v949, %v948
        %v961 = vpack.c.bf16 %v951, %v950
        %v962 = vpack.c.bf16 %v953, %v952
        %v963 = vpack.c.bf16 %v955, %v954
        %v964 = vld [vmem:[#allocation12] sm:$0xf]
        %v965 = vld [vmem:[#allocation12 + $0x4] sm:$0xf]
        %v966 = vld [vmem:[#allocation12 + $0x8] sm:$0xf]
        %v967 = vld [vmem:[#allocation12 + $0xc] sm:$0xf]
        %v968 = vld [vmem:[#allocation12 + $0x10] sm:$0xf]
        %v969 = vld [vmem:[#allocation12 + $0x14] sm:$0xf]
        %v970 = vld [vmem:[#allocation12 + $0x18] sm:$0xf]
        %v971 = vld [vmem:[#allocation12 + $0x1c] sm:$0xf]
        %v972 = vld [vmem:[#allocation12 + $0x20] sm:$0xf]
        %v973 = vld [vmem:[#allocation12 + $0x24] sm:$0xf]
        %v974 = vld [vmem:[#allocation12 + $0x28] sm:$0xf]
        %v975 = vld [vmem:[#allocation12 + $0x2c] sm:$0xf]
        %v976 = vld [vmem:[#allocation12 + $0x30] sm:$0xf]
        %v977 = vld [vmem:[#allocation12 + $0x34] sm:$0xf]
        %v978 = vld [vmem:[#allocation12 + $0x38] sm:$0xf]
        %v979 = vld [vmem:[#allocation12 + $0x3c] sm:$0xf]
        %v980 = vld [vmem:[#allocation14] sm:$0x1]
        %v982 = vlaneseq
        %v983 = vshrl.u32 %v982, 7
        %v984 = vsub.s32 0, %v983
        %v985 = vrot.slane %v980, %v984
        %v1003 = vunpack.c.l.b16 %v964
        %v1004 = vunpack.c.l.b16 %v965
        %v1005 = vunpack.c.l.b16 %v966
        %v1006 = vunpack.c.l.b16 %v967
        %v1007 = vunpack.c.l.b16 %v968
        %v1008 = vunpack.c.l.b16 %v969
        %v1009 = vunpack.c.l.b16 %v970
        %v1010 = vunpack.c.l.b16 %v971
        %v1011 = vunpack.c.l.b16 %v972
        %v1012 = vunpack.c.l.b16 %v973
        %v1013 = vunpack.c.l.b16 %v974
        %v1014 = vunpack.c.l.b16 %v975
        %v1015 = vunpack.c.l.b16 %v976
        %v1016 = vunpack.c.l.b16 %v977
        %v1017 = vunpack.c.l.b16 %v978
        %v1018 = vunpack.c.l.b16 %v979
        %v1019 = vpack.c.b16 %v1004, %v1003
        %v1020 = vpack.c.b16 %v1006, %v1005
        %v1021 = vpack.c.b16 %v1008, %v1007
        %v1022 = vpack.c.b16 %v1010, %v1009
        %v1023 = vpack.c.b16 %v1012, %v1011
        %v1024 = vpack.c.b16 %v1014, %v1013
        %v1025 = vpack.c.b16 %v1016, %v1015
        %v1026 = vpack.c.b16 %v1018, %v1017
        %1035 = vmatprep.subr.bf16.mxu0 0
        %1036 = vmatpush1.bf16.msra.mxu0 %v1019
        %1037 = vmatprep.subr.bf16.mxu0 0
        %1038 = vmatpush1.bf16.msra.mxu0 %v1020
        %1039 = vmatprep.subr.bf16.mxu0 0
        %1040 = vmatpush1.bf16.msra.mxu0 %v1021
        %1041 = vmatprep.subr.bf16.mxu0 0
        %1042 = vmatpush1.bf16.msra.mxu0 %v1022
        %1043 = vmatprep.subr.bf16.mxu0 0
        %1044 = vmatpush1.bf16.msra.mxu0 %v1023
        %1045 = vmatprep.subr.bf16.mxu0 0
        %1046 = vmatpush1.bf16.msra.mxu0 %v1024
        %1047 = vmatprep.subr.bf16.mxu0 0
        %1048 = vmatpush1.bf16.msra.mxu0 %v1025
        %1049 = vmatprep.subr.bf16.mxu0 0
        %1050 = vmatpush1.bf16.msra.mxu0 %v1026
        %1051 = vmatprep.subr.bf16.mxu0 0
        %1052 = vmatpush1.bf16.msra.mxu0 0
        %1053 = vmatprep.subr.bf16.mxu0 0
        %1054 = vmatpush1.bf16.msra.mxu0 0
        %1055 = vmatprep.subr.bf16.mxu0 0
        %1056 = vmatpush1.bf16.msra.mxu0 0
        %1057 = vmatprep.subr.bf16.mxu0 0
        %1058 = vmatpush1.bf16.msra.mxu0 0
        %1059 = vmatprep.subr.bf16.mxu0 0
        %1060 = vmatpush1.bf16.msra.mxu0 0
        %1061 = vmatprep.subr.bf16.mxu0 0
        %1062 = vmatpush1.bf16.msra.mxu0 0
        %1063 = vmatprep.subr.bf16.mxu0 0
        %1064 = vmatpush1.bf16.msra.mxu0 0
        %1065 = vmatprep.subr.bf16.mxu0 0
        %1066 = vmatpush1.bf16.msra.mxu0 0
        %1067 = vmatprep.mubr.bf16.mxu0 0
        %1068 = vmatmul.mubr.bf16.gmra.mrb[0].mxu0 %v956
        %v1069 = vpop.f32.mrb[0].mxu0
        %v1070 = vadd.f32 %v985, %v1069
        %v1071 = vpop.f32.mrb[0].mxu0
        %v1072 = vpop.f32.mrb[0].mxu0
        %v1073 = vadd.f32 %v985, %v1072
        %v1074 = vpop.f32.mrb[0].mxu0
        %1075 = vmatprep.mubr.bf16.mxu0 0
        %1076 = vmatmul.mubr.bf16.gmra.mrb[0].mxu0 %v957
        %v1077 = vpop.f32.mrb[0].mxu0
        %v1078 = vadd.f32 %v985, %v1077
        %v1079 = vpop.f32.mrb[0].mxu0
        %v1080 = vpop.f32.mrb[0].mxu0
        %v1081 = vadd.f32 %v985, %v1080
        %v1082 = vpop.f32.mrb[0].mxu0
        %1083 = vmatprep.mubr.bf16.mxu0 0
        %1084 = vmatmul.mubr.bf16.gmra.mrb[0].mxu0 %v958
        %v1085 = vpop.f32.mrb[0].mxu0
        %v1086 = vadd.f32 %v985, %v1085
        %v1087 = vpop.f32.mrb[0].mxu0
        %v1088 = vpop.f32.mrb[0].mxu0
        %v1089 = vadd.f32 %v985, %v1088
        %v1090 = vpop.f32.mrb[0].mxu0
        %1091 = vmatprep.mubr.bf16.mxu0 0
        %1092 = vmatmul.mubr.bf16.gmra.mrb[0].mxu0 %v959
        %v1093 = vpop.f32.mrb[0].mxu0
        %v1094 = vadd.f32 %v985, %v1093
        %v1095 = vpop.f32.mrb[0].mxu0
        %v1096 = vpop.f32.mrb[0].mxu0
        %v1097 = vadd.f32 %v985, %v1096
        %v1098 = vpop.f32.mrb[0].mxu0
        %1099 = vmatprep.mubr.bf16.mxu0 0
        %1100 = vmatmul.mubr.bf16.gmra.mrb[0].mxu0 %v960
        %v1101 = vpop.f32.mrb[0].mxu0
        %v1102 = vadd.f32 %v985, %v1101
        %v1103 = vpop.f32.mrb[0].mxu0
        %v1104 = vpop.f32.mrb[0].mxu0
        %v1105 = vadd.f32 %v985, %v1104
        %v1106 = vpop.f32.mrb[0].mxu0
        %1107 = vmatprep.mubr.bf16.mxu0 0
        %1108 = vmatmul.mubr.bf16.gmra.mrb[0].mxu0 %v961
        %v1109 = vpop.f32.mrb[0].mxu0
        %v1110 = vadd.f32 %v985, %v1109
        %v1111 = vpop.f32.mrb[0].mxu0
        %v1112 = vpop.f32.mrb[0].mxu0
        %v1113 = vadd.f32 %v985, %v1112
        %v1114 = vpop.f32.mrb[0].mxu0
        %1115 = vmatprep.mubr.bf16.mxu0 0
        %1116 = vmatmul.mubr.bf16.gmra.mrb[0].mxu0 %v962
        %v1117 = vpop.f32.mrb[0].mxu0
        %v1118 = vadd.f32 %v985, %v1117
        %v1119 = vpop.f32.mrb[0].mxu0
        %v1120 = vpop.f32.mrb[0].mxu0
        %v1121 = vadd.f32 %v985, %v1120
        %v1122 = vpop.f32.mrb[0].mxu0
        %1123 = vmatprep.mubr.bf16.mxu0 0
        %1124 = vmatmul.mubr.bf16.gmra.mrb[0].mxu0 %v963
        %v1125 = vpop.f32.mrb[0].mxu0
        %v1126 = vadd.f32 %v985, %v1125
        %v1127 = vpop.f32.mrb[0].mxu0
        %v1128 = vpop.f32.mrb[0].mxu0
        %v1129 = vadd.f32 %v985, %v1128
        %v1130 = vpop.f32.mrb[0].mxu0
        %1131 = vdwg.mxu0
        %v1132 = vld [vmem:[%s464] sm:$0xff]
        %v1133 = vld [vmem:[%s464 + $0x8] sm:$0xff]
        %v1134 = vld [vmem:[%s464 + $0x10] sm:$0xff]
        %v1135 = vld [vmem:[%s464 + $0x18] sm:$0xff]
        %v1136 = vld [vmem:[%s464 + $0x20] sm:$0xff]
        %v1137 = vld [vmem:[%s464 + $0x28] sm:$0xff]
        %v1138 = vld [vmem:[%s464 + $0x30] sm:$0xff]
        %v1139 = vld [vmem:[%s464 + $0x38] sm:$0xff]
        %v1140 = vld [vmem:[%s464 + $0x40] sm:$0xff]
        %v1141 = vld [vmem:[%s464 + $0x48] sm:$0xff]
        %v1142 = vld [vmem:[%s464 + $0x50] sm:$0xff]
        %v1143 = vld [vmem:[%s464 + $0x58] sm:$0xff]
        %v1144 = vld [vmem:[%s464 + $0x60] sm:$0xff]
        %v1145 = vld [vmem:[%s464 + $0x68] sm:$0xff]
        %v1146 = vld [vmem:[%s464 + $0x70] sm:$0xff]
        %v1147 = vld [vmem:[%s464 + $0x78] sm:$0xff]
        %v1148 = vmul.f32 %v1132, 0.5
        %v1149 = vmul.f32 %v1133, 0.5
        %v1150 = vmul.f32 %v1134, 0.5
        %v1151 = vmul.f32 %v1135, 0.5
        %v1152 = vmul.f32 %v1136, 0.5
        %v1153 = vmul.f32 %v1137, 0.5
        %v1154 = vmul.f32 %v1138, 0.5
        %v1155 = vmul.f32 %v1139, 0.5
        %v1156 = vmul.f32 %v1140, 0.5
        %v1157 = vmul.f32 %v1141, 0.5
        %v1158 = vmul.f32 %v1142, 0.5
        %v1159 = vmul.f32 %v1143, 0.5
        %v1160 = vmul.f32 %v1144, 0.5
        %v1161 = vmul.f32 %v1145, 0.5
        %v1162 = vmul.f32 %v1146, 0.5
        %v1163 = vmul.f32 %v1147, 0.5
        %v1164 = vmul.f32 %v1070, 0.5
        %v1165 = vmul.f32 %v1073, 0.5
        %v1166 = vmul.f32 %v1078, 0.5
        %v1167 = vmul.f32 %v1081, 0.5
        %v1168 = vmul.f32 %v1086, 0.5
        %v1169 = vmul.f32 %v1089, 0.5
        %v1170 = vmul.f32 %v1094, 0.5
        %v1171 = vmul.f32 %v1097, 0.5
        %v1172 = vmul.f32 %v1102, 0.5
        %v1173 = vmul.f32 %v1105, 0.5
        %v1174 = vmul.f32 %v1110, 0.5
        %v1175 = vmul.f32 %v1113, 0.5
        %v1176 = vmul.f32 %v1118, 0.5
        %v1177 = vmul.f32 %v1121, 0.5
        %v1178 = vmul.f32 %v1126, 0.5
        %v1179 = vmul.f32 %v1129, 0.5
        %v1180 = vadd.f32 %v1148, %v1164
        %v1181 = vadd.f32 %v1149, %v1165
        %v1182 = vadd.f32 %v1150, %v1166
        %v1183 = vadd.f32 %v1151, %v1167
        %v1184 = vadd.f32 %v1152, %v1168
        %v1185 = vadd.f32 %v1153, %v1169
        %v1186 = vadd.f32 %v1154, %v1170
        %v1187 = vadd.f32 %v1155, %v1171
        %v1188 = vadd.f32 %v1156, %v1172
        %v1189 = vadd.f32 %v1157, %v1173
        %v1190 = vadd.f32 %v1158, %v1174
        %v1191 = vadd.f32 %v1159, %v1175
        %v1192 = vadd.f32 %v1160, %v1176
        %v1193 = vadd.f32 %v1161, %v1177
        %v1194 = vadd.f32 %v1162, %v1178
        %v1195 = vadd.f32 %v1163, %v1179
        %s1196 = sld [smem:[#allocation2]]
        %p1197 = scmp.ne.s32.totalorder %s1196, 0
        %s1198 = scalar_select %p1197, 1, 0
        %v1199 = vstv %s1198
        %vm1200 = vcmp.eq.s32.totalorder %v1199, 1
        %v1201 = vsel %vm1200, %v1070, %v1180
        %v1202 = vsel %vm1200, %v1073, %v1181
        %v1203 = vsel %vm1200, %v1078, %v1182
        %v1204 = vsel %vm1200, %v1081, %v1183
        %v1205 = vsel %vm1200, %v1086, %v1184
        %v1206 = vsel %vm1200, %v1089, %v1185
        %v1207 = vsel %vm1200, %v1094, %v1186
        %v1208 = vsel %vm1200, %v1097, %v1187
        %v1209 = vsel %vm1200, %v1102, %v1188
        %v1210 = vsel %vm1200, %v1105, %v1189
        %v1211 = vsel %vm1200, %v1110, %v1190
        %v1212 = vsel %vm1200, %v1113, %v1191
        %v1213 = vsel %vm1200, %v1118, %v1192
        %v1214 = vsel %vm1200, %v1121, %v1193
        %v1215 = vsel %vm1200, %v1126, %v1194
        %v1216 = vsel %vm1200, %v1129, %v1195
        %1217 = vst [vmem:[%s503] sm:$0xff] %v1070
        %1218 = vst [vmem:[%s503 + $0x8] sm:$0xff] %v1073
        %1219 = vst [vmem:[%s503 + $0x10] sm:$0xff] %v1078
        %1220 = vst [vmem:[%s503 + $0x18] sm:$0xff] %v1081
        %1221 = vst [vmem:[%s503 + $0x20] sm:$0xff] %v1086
        %1222 = vst [vmem:[%s503 + $0x28] sm:$0xff] %v1089
        %1223 = vst [vmem:[%s503 + $0x30] sm:$0xff] %v1094
        %1224 = vst [vmem:[%s503 + $0x38] sm:$0xff] %v1097
        %1225 = vst [vmem:[%s503 + $0x40] sm:$0xff] %v1102
        %1226 = vst [vmem:[%s503 + $0x48] sm:$0xff] %v1105
        %1227 = vst [vmem:[%s503 + $0x50] sm:$0xff] %v1110
        %1228 = vst [vmem:[%s503 + $0x58] sm:$0xff] %v1113
        %1229 = vst [vmem:[%s503 + $0x60] sm:$0xff] %v1118
        %1230 = vst [vmem:[%s503 + $0x68] sm:$0xff] %v1121
        %1231 = vst [vmem:[%s503 + $0x70] sm:$0xff] %v1126
        %1232 = vst [vmem:[%s503 + $0x78] sm:$0xff] %v1129
        %v1233 = vpack.c.bf16 %v1202, %v1201
        %v1234 = vpack.c.bf16 %v1204, %v1203
        %v1235 = vpack.c.bf16 %v1206, %v1205
        %v1236 = vpack.c.bf16 %v1208, %v1207
        %v1237 = vpack.c.bf16 %v1210, %v1209
        %v1238 = vpack.c.bf16 %v1212, %v1211
        %v1239 = vpack.c.bf16 %v1214, %v1213
        %v1240 = vpack.c.bf16 %v1216, %v1215
        %v1249 = vunpack.c.l.b16 %v1233
        %v1250 = vunpack.c.h.b16 %v1233
        %v1251 = vunpack.c.l.b16 %v1234
        %v1252 = vunpack.c.h.b16 %v1234
        %v1253 = vunpack.c.l.b16 %v1235
        %v1254 = vunpack.c.h.b16 %v1235
        %v1255 = vunpack.c.l.b16 %v1236
        %v1256 = vunpack.c.h.b16 %v1236
        %v1257 = vunpack.c.l.b16 %v1237
        %v1258 = vunpack.c.h.b16 %v1237
        %v1259 = vunpack.c.l.b16 %v1238
        %v1260 = vunpack.c.h.b16 %v1238
        %v1261 = vunpack.c.l.b16 %v1239
        %v1262 = vunpack.c.h.b16 %v1239
        %v1263 = vunpack.c.l.b16 %v1240
        %v1264 = vunpack.c.h.b16 %v1240
        %v1265 = vpack.c.b16 %v1249, %v1249
        %v1266 = vpack.c.b16 %v1250, %v1250
        %v1267 = vpack.c.b16 %v1251, %v1251
        %v1268 = vpack.c.b16 %v1252, %v1252
        %v1269 = vpack.c.b16 %v1253, %v1253
        %v1270 = vpack.c.b16 %v1254, %v1254
        %v1271 = vpack.c.b16 %v1255, %v1255
        %v1272 = vpack.c.b16 %v1256, %v1256
        %v1273 = vpack.c.b16 %v1257, %v1257
        %v1274 = vpack.c.b16 %v1258, %v1258
        %v1275 = vpack.c.b16 %v1259, %v1259
        %v1276 = vpack.c.b16 %v1260, %v1260
        %v1277 = vpack.c.b16 %v1261, %v1261
        %v1278 = vpack.c.b16 %v1262, %v1262
        %v1279 = vpack.c.b16 %v1263, %v1263
        %v1280 = vpack.c.b16 %v1264, %v1264
        %1297 = vst [vmem:[%s510] sm:$0xf] %v1265
        %1298 = vst [vmem:[%s510 + $0x4] sm:$0xf] %v1266
        %1299 = vst [vmem:[%s510 + $0x8] sm:$0xf] %v1267
        %1300 = vst [vmem:[%s510 + $0xc] sm:$0xf] %v1268
        %1301 = vst [vmem:[%s510 + $0x10] sm:$0xf] %v1269
        %1302 = vst [vmem:[%s510 + $0x14] sm:$0xf] %v1270
        %1303 = vst [vmem:[%s510 + $0x18] sm:$0xf] %v1271
        %1304 = vst [vmem:[%s510 + $0x1c] sm:$0xf] %v1272
        %1305 = vst [vmem:[%s510 + $0x20] sm:$0xf] %v1273
        %1306 = vst [vmem:[%s510 + $0x24] sm:$0xf] %v1274
        %1307 = vst [vmem:[%s510 + $0x28] sm:$0xf] %v1275
        %1308 = vst [vmem:[%s510 + $0x2c] sm:$0xf] %v1276
        %1309 = vst [vmem:[%s510 + $0x30] sm:$0xf] %v1277
        %1310 = vst [vmem:[%s510 + $0x34] sm:$0xf] %v1278
        %1311 = vst [vmem:[%s510 + $0x38] sm:$0xf] %v1279
        %1312 = vst [vmem:[%s510 + $0x3c] sm:$0xf] %v1280
        %s1313 = sand.u32 %s245, 1
        %s1314 = scalar_lea.sflag [#allocation5], %s1313
        %s1315 = sand.u32 %s245, 1
        %s1316 = smul.addr %s1315, 128
        %s1317 = scalar_lea.vmem [#allocation17], %s1316
        %s1318 = sand.u32 %s271, 1
        %s1319 = scalar_lea.sflag [#allocation19], %s1318
        %s1320 = sand.u32 %s271, 1
        %s1321 = smul.addr %s1320, 64
        %s1322 = scalar_lea.vmem [#allocation18], %s1321
        // Predicated region
        $region89: #{tpu_custom_call.1} parent=55 // pred_check
          %p1323 = pneg %p255
        $region90: #{tpu_custom_call.1} parent=55 // pred_check_branch
          %1325 = sbr.rel (%p1323) target = $region92
        $region91: #{tpu_custom_call.1} parent=55 // pred_region
          %s1326 = smul.u32 16, %s38
          %s1328 = ssub.s32 2048, 2048
          %1329 = vsyncadd %s1314, %s1328
          %s1330 = smul.addr %s1326, 128
          %s1331 = scalar_lea.hbm %s9, %s1330
          %s1332 = sshll.u32 %s1317, 4
          %s1333 = int_to_ptr.vmem [resolvable:$true] %s1332
          %1338 = dma.vmem_to_hbm [thread:$0]  %s1333, 2048, %s1331, %s1314, 128, 128, 8
        $region92: #{tpu_custom_call.1} parent=55 // pred_fallthru
          _
        // Predicated region
        $region93: #{tpu_custom_call.1} parent=55 // pred_check
          %p1339 = pneg %p281
        $region94: #{tpu_custom_call.1} parent=55 // pred_check_branch
          %1341 = sbr.rel (%p1339) target = $region96
        $region95: #{tpu_custom_call.1} parent=55 // pred_region
          %s1342 = smul.u32 16, %s38
          %s1344 = ssub.s32 1024, 1024
          %1345 = vsyncadd %s1319, %s1344
          %s1346 = smul.addr %s1342, 64
          %s1347 = scalar_lea.hbm %s10, %s1346
          %s1348 = sshll.u32 %s1322, 4
          %s1349 = int_to_ptr.vmem [resolvable:$true] %s1348
          %1354 = dma.vmem_to_hbm [thread:$0]  %s1349, 1024, %s1347, %s1319, 64, 64, 4
        $region96: #{tpu_custom_call.1} parent=55 // pred_fallthru
          _
      $region56: #{tpu_custom_call.1} parent=5 // pred_fallthru
        _
      %p1355 = scmp.le.s32.totalorder 2, %s33
      // Predicated region
      $region97: #{tpu_custom_call.1} parent=5 // pred_check
        %p1356 = pneg %p1355
      $region98: #{tpu_custom_call.1} parent=5 // pred_check_branch
        %1358 = sbr.rel (%p1356) target = $region100
      $region99: #{tpu_custom_call.1} parent=5 // pred_region
        %s1359 = ssub.s32 %s33, 2
        // Predicated region
        $region101: #{tpu_custom_call.1} parent=99 // pred_check
          %p1360 = pneg %p261
        $region102: #{tpu_custom_call.1} parent=99 // pred_check_branch
          %1362 = sbr.rel (%p1360) target = $region104
        $region103: #{tpu_custom_call.1} parent=99 // pred_region
          %s1363 = sand.u32 %s246, 1
          %s1364 = scalar_lea.sflag [#allocation5], %s1363
          %s1365 = sand.u32 %s246, 1
          %s1366 = smul.addr %s1365, 128
          %s1367 = scalar_lea.vmem [#allocation17], %s1366
          %1368 = dma.done %s1364, 2048
        $region104: #{tpu_custom_call.1} parent=99 // pred_fallthru
          _
        // Predicated region
        $region105: #{tpu_custom_call.1} parent=99 // pred_check
          %p1369 = pneg %p287
        $region106: #{tpu_custom_call.1} parent=99 // pred_check_branch
          %1371 = sbr.rel (%p1369) target = $region108
        $region107: #{tpu_custom_call.1} parent=99 // pred_region
          %s1372 = sand.u32 %s272, 1
          %s1373 = scalar_lea.sflag [#allocation19], %s1372
          %s1374 = sand.u32 %s272, 1
          %s1375 = smul.addr %s1374, 64
          %s1376 = scalar_lea.vmem [#allocation18], %s1375
          %1377 = dma.done %s1373, 1024
        $region108: #{tpu_custom_call.1} parent=99 // pred_fallthru
          _
      $region100: #{tpu_custom_call.1} parent=5 // pred_fallthru
        _
    $region6: #{tpu_custom_call.1} parent=1 // loop_footer
      %s37 = sadd.s32 1, %s33
    $region7: #{tpu_custom_call.1} parent=1 // loop_footer_branch
      %32 = sbr.rel target = $region3
    $region8: #{tpu_custom_call.1} parent=1 // loop_exit
      _
    %1378 = vsyncpa [#allocation4], 1
    %s1379 = scalar_lea.sflag [#allocation4], 1
    %1380 = vsyncpa %s1379, 1
    %1381 = vsyncpa [#allocation7], 1
    %1382 = vsyncpa [#allocation10], 1
    %1383 = vsyncpa [#allocation13], 1
    %1384 = vsyncpa [#allocation16], 1
    %s1385 = scalar_lea.sflag [#allocation16], 1
    %1386 = vsyncpa %s1385, 1
    %1387 = vsyncpa [#allocation5], 1
    %s1388 = scalar_lea.sflag [#allocation5], 1
    %1389 = vsyncpa %s1388, 1
    %1390 = vsyncpa [#allocation19], 1
    %s1391 = scalar_lea.sflag [#allocation19], 1
    %1392 = vsyncpa %s1391, 1

</llo_original>
